<compile_context>
chip_gen: v7x
topology: tpu7x:2x2x1
jax: 0.10.0
libtpu: 0.0.40
codegen_flags: <defaults>
</compile_context>

<pallas_src>
import jax
import jax.numpy as jnp
from jax.experimental import pallas as pl
from jax.experimental.pallas import tpu as pltpu


def question_embedding_kernel(x_ref, w_ref, b_ref, out_ref):
    TB, L, D = x_ref.shape

    # One big matmul against the concatenated weights: (TB*L, D) @ (D, 2304).
    x = x_ref[...].reshape(TB * L, D)
    s = jnp.dot(x, w_ref[...], preferred_element_type=jnp.float32)
    s = s.reshape(TB, L, 2304)

    # Channel layout of the concatenated RHS (all offsets lane-aligned):
    #   [  0: 256)  conv1 (k=1) weights
    #   [256: 512)  conv2 row 0
    #   [512: 768)  conv2 row 1
    #   [768:1280)  conv3 row 0
    #   [1280:1792) conv3 row 1
    #   [1792:2304) conv3 row 2

    # ---- conv1 (k=1, 256 ch): max over all L positions ----
    m1 = jnp.max(s[:, :, 0:256], axis=1)                                  # (TB, 256)

    # ---- conv2 (k=2, 256 ch): s2[t] = row0[t] + row1[t+1], t in [0, L-2] ----
    s2 = s[:, : L - 1, 256:512] + s[:, 1:, 512:768]
    m2 = jnp.max(s2, axis=1)                                              # (TB, 256)

    # ---- conv3 (k=3, 512 ch): s3[t] = row0[t] + row1[t+1] + row2[t+2] ----
    s3 = (s[:, : L - 2, 768:1280]
          + s[:, 1 : L - 1, 1280:1792]
          + s[:, 2:, 1792:2304])
    m3 = jnp.max(s3, axis=1)                                              # (TB, 512)

    # Bias + tanh hoisted after the max (exact: tanh monotone, bias constant
    # per channel).  Single dense (TB, 1024) store.
    pooled = jnp.concatenate([m1, m2, m3], axis=1)                        # (TB, 1024)
    out_ref[...] = jnp.tanh(pooled + b_ref[...])


def _pick_tb(B):
    """Batch tile: a multiple of 8 dividing B (dense output sublanes), <=256,
    preferring >=2 grid steps so both v7x TensorCores get work."""
    candidates = [t for t in range(8, min(B, 256) + 1, 8) if B % t == 0]
    two_step = [t for t in candidates if B // t >= 2]
    if two_step:
        return max(two_step)
    if candidates:
        return max(candidates)
    return B  # block == full batch dim (still a legal BlockSpec)


def question_embedding(x, params, *, tb=None):
    """x: (B, L, D) float32 -> (B, 1024) float32 (matches the PyTorch forward).
    Assumes L >= 3 (same as the PyTorch module needs for conv3)."""
    B, L, D = x.shape
    w1, b1 = params["w1"], params["b1"]          # (256, D), (256,)
    w2, b2 = params["w2"], params["b2"]          # (256, 2, D), (256,)
    w3, b3 = params["w3"], params["b3"]          # (512, 3, D), (512,)

    # Host-side glue: split conv weights by kernel row, transpose, and
    # concatenate everything into ONE (D, 2304) RHS.  Biases concatenate in
    # output-channel order [b1 | b2 | b3] -> (1, 1024).
    w_cat = jnp.concatenate(
        [w1.T,                                   # conv1            (D, 256)
         w2[:, 0, :].T, w2[:, 1, :].T,           # conv2 rows 0,1   (D, 256) x2
         w3[:, 0, :].T, w3[:, 1, :].T, w3[:, 2, :].T],  # conv3 rows (D, 512) x3
        axis=1)                                  # (D, 2304)
    b_cat = jnp.concatenate([b1, b2, b3]).reshape(1, 1024)

    if tb is None:
        tb = _pick_tb(B)
    assert B % tb == 0, (B, tb)
    n_steps = B // tb

    return pl.pallas_call(
        question_embedding_kernel,
        out_shape=jax.ShapeDtypeStruct((B, 1024), jnp.float32),
        grid_spec=pltpu.PrefetchScalarGridSpec(
            num_scalar_prefetch=0,
            grid=(n_steps,),
            in_specs=[
                pl.BlockSpec((tb, L, D), lambda i: (i, 0, 0)),
                pl.BlockSpec((D, 2304), lambda i: (0, 0)),
                pl.BlockSpec((1, 1024), lambda i: (0, 0)),
            ],
            out_specs=pl.BlockSpec((tb, 1024), lambda i: (i, 0)),
        ),
        compiler_params=pltpu.CompilerParams(
            dimension_semantics=("parallel",),
        ),
    )(x, w_cat, b_cat)


def reference(x, params):
    """Pure-JAX re-implementation of the PyTorch forward for verification."""
    def conv_tanh_max(x, w, b):          # w: (C, k, D)
        B, L, D = x.shape
        C, k, _ = w.shape
        wf = w.reshape(C, k * D)
        cols = []
        for t in range(L - k + 1):
            win = x[:, t : t + k, :].reshape(B, k * D)
            cols.append(win @ wf.T + b)  # (B, C)
        s = jnp.stack(cols, axis=1)      # (B, L-k+1, C)
        return jnp.max(jnp.tanh(s), axis=1)

    m1 = conv_tanh_max(x, params["w1"][:, None, :], params["b1"])
    m2 = conv_tanh_max(x, params["w2"], params["b2"])
    m3 = conv_tanh_max(x, params["w3"], params["b3"])
    return jnp.concatenate([m1, m2, m3], axis=1)


if __name__ == "__main__":
    key = jax.random.PRNGKey(0)
    B, L, D = 16, 8, 32                   # batch, sequence length, in_dim
    ks = jax.random.split(key, 7)
    x = jax.random.normal(ks[0], (B, L, D), jnp.float32)
    params = dict(
        w1=jax.random.normal(ks[1], (256, D), jnp.float32) * 0.1,
        b1=jax.random.normal(ks[2], (256,), jnp.float32) * 0.1,
        w2=jax.random.normal(ks[3], (256, 2, D), jnp.float32) * 0.1,
        b2=jax.random.normal(ks[4], (256,), jnp.float32) * 0.1,
        w3=jax.random.normal(ks[5], (512, 3, D), jnp.float32) * 0.1,
        b3=jax.random.normal(ks[6], (512,), jnp.float32) * 0.1,
    )

    out = question_embedding(x, params)
    jax.block_until_ready(out)

    ref = reference(x, params)
    assert out.shape == (B, 1024), out.shape
    assert jnp.allclose(out, ref, atol=1e-5, rtol=1e-5), float(jnp.max(jnp.abs(out - ref)))
    print("KERNEL_OK")
</pallas_src>

<mosaic_0001>
module attributes {stable_mosaic.version = 11 : i64} {
  func.func @question_embedding_kernel(%arg0: i32, %arg1: memref<8x8x32xf32, #tpu.memory_space<vmem>>, %arg2: memref<32x2304xf32, #tpu.memory_space<vmem>>, %arg3: memref<1x1024xf32, #tpu.memory_space<vmem>>, %arg4: memref<8x1024xf32, #tpu.memory_space<vmem>>) attributes {dimension_semantics = [#tpu.dimension_semantics<parallel>], iteration_bounds = array<i64: 2>, scalar_prefetch = 0 : i64, scratch_operands = 0 : i64, tpu.core_type = #tpu.core_type<tc>, window_params = [{transform_indices = @transform_0, window_bounds = array<i64: 8, 8, 32>}, {pipeline_mode = #tpu.pipeline_mode<synchronous>, transform_indices = @transform_1, window_bounds = array<i64: 32, 2304>}, {pipeline_mode = #tpu.pipeline_mode<synchronous>, transform_indices = @transform_2, window_bounds = array<i64: 1, 1024>}, {transform_indices = @transform_3, window_bounds = array<i64: 8, 1024>}]} {
    %c0 = arith.constant 0 : index
    %c0_0 = arith.constant 0 : index
    %c0_1 = arith.constant 0 : index
    %0 = vector.load %arg1[%c0, %c0_0, %c0_1] : memref<8x8x32xf32, #tpu.memory_space<vmem>>, vector<8x8x32xf32>
    %1 = vector.shape_cast %0 : vector<8x8x32xf32> to vector<64x32xf32>
    %c0_2 = arith.constant 0 : index
    %c0_3 = arith.constant 0 : index
    %2 = vector.load %arg2[%c0_2, %c0_3] : memref<32x2304xf32, #tpu.memory_space<vmem>>, vector<32x2304xf32>
    %cst = arith.constant dense<0.000000e+00> : vector<64x2304xf32>
    %3 = tpu.matmul %1, %2, %cst {dimension_numbers = #tpu.dot_dimension_numbers<[1], [0], [0], [1], [0, 0, 1, 1], [], []>} : vector<64x32xf32>, vector<32x2304xf32>, vector<64x2304xf32> -> vector<64x2304xf32>
    %4 = vector.shape_cast %3 : vector<64x2304xf32> to vector<8x8x2304xf32>
    %5 = vector.extract_strided_slice %4 {offsets = [0, 0, 0], sizes = [8, 8, 256], strides = [1, 1, 1]} : vector<8x8x2304xf32> to vector<8x8x256xf32>
    %cst_4 = arith.constant dense<0xFF800000> : vector<8x256xf32>
    %6 = vector.multi_reduction <maximumf>, %5, %cst_4 [1] : vector<8x8x256xf32> to vector<8x256xf32>
    %7 = vector.extract_strided_slice %4 {offsets = [0, 0, 256], sizes = [8, 7, 256], strides = [1, 1, 1]} : vector<8x8x2304xf32> to vector<8x7x256xf32>
    %8 = vector.extract_strided_slice %4 {offsets = [0, 1, 512], sizes = [8, 7, 256], strides = [1, 1, 1]} : vector<8x8x2304xf32> to vector<8x7x256xf32>
    %9 = arith.addf %7, %8 : vector<8x7x256xf32>
    %cst_5 = arith.constant dense<0xFF800000> : vector<8x256xf32>
    %10 = vector.multi_reduction <maximumf>, %9, %cst_5 [1] : vector<8x7x256xf32> to vector<8x256xf32>
    %11 = vector.extract_strided_slice %4 {offsets = [0, 0, 768], sizes = [8, 6, 512], strides = [1, 1, 1]} : vector<8x8x2304xf32> to vector<8x6x512xf32>
    %12 = vector.extract_strided_slice %4 {offsets = [0, 1, 1280], sizes = [8, 6, 512], strides = [1, 1, 1]} : vector<8x8x2304xf32> to vector<8x6x512xf32>
    %13 = arith.addf %11, %12 : vector<8x6x512xf32>
    %14 = vector.extract_strided_slice %4 {offsets = [0, 2, 1792], sizes = [8, 6, 512], strides = [1, 1, 1]} : vector<8x8x2304xf32> to vector<8x6x512xf32>
    %15 = arith.addf %13, %14 : vector<8x6x512xf32>
    %cst_6 = arith.constant dense<0xFF800000> : vector<8x512xf32>
    %16 = vector.multi_reduction <maximumf>, %15, %cst_6 [1] : vector<8x6x512xf32> to vector<8x512xf32>
    %17 = tpu.concatenate %6, %10, %16 in 1 : vector<8x256xf32>, vector<8x256xf32>, vector<8x512xf32> -> vector<8x1024xf32>
    %c0_7 = arith.constant 0 : index
    %c0_8 = arith.constant 0 : index
    %18 = vector.load %arg3[%c0_7, %c0_8] : memref<1x1024xf32, #tpu.memory_space<vmem>>, vector<1x1024xf32>
    %19 = vector.broadcast %18 : vector<1x1024xf32> to vector<8x1024xf32>
    %20 = arith.addf %17, %19 : vector<8x1024xf32>
    %21 = math.tanh %20 : vector<8x1024xf32>
    %c0_9 = arith.constant 0 : index
    %c0_10 = arith.constant 0 : index
    %22 = vector.load %arg4[%c0_9, %c0_10] : memref<8x1024xf32, #tpu.memory_space<vmem>>, vector<8x1024xf32>
    tpu.vector_store %arg4[%c0_9, %c0_10], %21 {strides = array<i32>} : memref<8x1024xf32, #tpu.memory_space<vmem>>, vector<8x1024xf32>,
    return
  }
  func.func @transform_0(%arg0: i32) -> (i32, i32, i32) {
    %c0_i32 = arith.constant 0 : i32
    %c0_i32_0 = arith.constant 0 : i32
    %c0_i32_1 = arith.constant 0 : i32
    return %arg0, %c0_i32, %c0_i32_0 : i32, i32, i32
  }
  func.func @transform_1(%arg0: i32) -> (i32, i32) {
    %c0_i32 = arith.constant 0 : i32
    %c0_i32_0 = arith.constant 0 : i32
    %c0_i32_1 = arith.constant 0 : i32
    return %c0_i32, %c0_i32_0 : i32, i32
  }
  func.func @transform_2(%arg0: i32) -> (i32, i32) {
    %c0_i32 = arith.constant 0 : i32
    %c0_i32_0 = arith.constant 0 : i32
    %c0_i32_1 = arith.constant 0 : i32
    return %c0_i32, %c0_i32_0 : i32, i32
  }
  func.func @transform_3(%arg0: i32) -> (i32, i32) {
    %c0_i32 = arith.constant 0 : i32
    %c0_i32_0 = arith.constant 0 : i32
    return %arg0, %c0_i32 : i32, i32
  }
}

</mosaic_0001>

<llo_original>
// kernel: tpu_custom_call.1
$region0: #{tpu_custom_call.1}
  #allocation0 [shape = 'u32[]', space=smem, size = 0x4, offset = 0x4, fixed_abs, tag = 'smem constant byte address 0x4 - core index']
  #allocation1 [shape = 'u32[144,128]{1,0:T(1,128)}', space=vmem, size = 0x12000, scoped, tag = 'internal scratch']
  %s0 = inlined_call_operand.hbm [shape: f32[16,8,32], index: 0, kind: input, shape index: {}]
  %s1 = inlined_call_operand.hbm [shape: f32[32,2304], index: 1, kind: input, shape index: {}]
  %s2 = inlined_call_operand.hbm [shape: f32[1,1024], index: 2, kind: input, shape index: {}]
  %s3 = inlined_call_operand.hbm [shape: f32[16,1024], index: 3, kind: output, shape index: {}]
  %s4 = sld [smem:[#allocation0]]
  $region57: #{tpu_custom_call.1} parent=0
    _
  %s6 = ssub.s32 1, %s4
  %s7 = scalar_select 0, %s6, %s4
  $region1: #{tpu_custom_call.1} parent=0
    #allocation2 [shape = 'u8[65536]{0}', space=vmem, size = 0x10000, scoped, tag = 'input window, operand 0']
    #allocation3 [shape = 's32[2]{0}', space=sflag, size = 0x8, scoped, tag = 'scoped memory for tpu_custom_call.1']
    #allocation4 [shape = 's32[2]{0}', space=sflag, size = 0x8, scoped, tag = 'scoped memory for tpu_custom_call.1']
    #allocation5 [shape = 'u8[294912]{0}', space=vmem, size = 0x48000, scoped, tag = 'input window, operand 1, single buffered']
    #allocation6 [shape = 's32[1]{0}', space=sflag, size = 0x4, scoped, tag = 'scoped memory for tpu_custom_call.1']
    #allocation7 [shape = 'u8[4096]{0}', space=vmem, size = 0x1000, scoped, tag = 'input window, operand 2, single buffered']
    #allocation8 [shape = 'u8[65536]{0}', space=vmem, size = 0x10000, scoped, tag = 'output window, operand 0']
    %8 = vsyncpa [#allocation3], 0
    %s9 = scalar_lea.sflag [#allocation3], 1
    %10 = vsyncpa %s9, 0
    %11 = vsyncpa [#allocation6], 0
    %12 = vsyncpa [#allocation4], 0
    %s13 = scalar_lea.sflag [#allocation4], 1
    %14 = vsyncpa %s13, 0
    loop: start=0, step=1, limit=4
    $region2: #{tpu_custom_call.1} parent=1 // loop_pre_header
      _
    $region3: #{tpu_custom_call.1} parent=1 // loop_header
      %s16 = sphi 0, %s20
      %p17 = scmp.ge.s32.totalorder %s16, 4
      %s26 = sphi 0, %s28
      %s29 = sphi 0, %s26
      %s30 = sphi 0, %s29
      %s46 = sphi 0, %s30
      %s50 = sphi 0, %s50
      %s52 = sphi 0, %s50
      %s53 = sphi 0, %s52
      %s67 = sphi 0, %s53
      %s71 = sphi 0, %s71
      %s73 = sphi 0, %s71
      %s74 = sphi 0, %s73
      %s88 = sphi 0, %s74
      %s94 = sphi 0, %s96
      %s97 = sphi 0, %s94
      %s98 = sphi 0, %s97
      %s114 = sphi 0, %s98
    $region4: #{tpu_custom_call.1} parent=1 // loop_header_branch
      %19 = sbr.rel (%p17) target = $region8
    $region5: #{tpu_custom_call.1} parent=1 // loop_body
      %s21 = ssub.s32 %s16, 1
      %s22 = ssub.s32 %s16, 2
      %s23 = sadd.s32 %s16, 1
      %s24 = ssub.s32 %s16, %s23
      %p25 = scmp.eq.s32.totalorder %s24, 0
      %s27 = sadd.s32 %s26, 1
      %s28 = scalar_select %p25, %s26, %s27
      %p31 = pneg %p25
      %p32 = scmp.eq.s32.totalorder %s16, 1
      %p33 = por %p31, %p32
      %p34 = scmp.ne.s32.totalorder %s26, %s29
      %p35 = scmp.eq.s32.totalorder %s16, 0
      %p36 = por %p34, %p35
      %p37 = scmp.ne.s32.totalorder %s26, %s29
      %p38 = scmp.eq.s32.totalorder %s21, 1
      %p39 = por %p37, %p38
      %p40 = scmp.ne.s32.totalorder %s29, %s30
      %p41 = scmp.eq.s32.totalorder %s21, 0
      %p42 = por %p40, %p41
      %p43 = scmp.ne.s32.totalorder %s29, %s30
      %p44 = scmp.eq.s32.totalorder %s22, 1
      %p45 = por %p43, %p44
      %p47 = scmp.ne.s32.totalorder %s30, %s46
      %p48 = scmp.eq.s32.totalorder %s22, 0
      %p49 = por %p47, %p48
      %s51 = sadd.s32 %s50, 1
      %p54 = scmp.eq.s32.totalorder %s16, 1
      %p55 = scmp.ne.s32.totalorder %s50, %s52
      %p56 = scmp.eq.s32.totalorder %s16, 0
      %p57 = por %p55, %p56
      %p58 = scmp.ne.s32.totalorder %s50, %s52
      %p59 = scmp.eq.s32.totalorder %s21, 1
      %p60 = por %p58, %p59
      %p61 = scmp.ne.s32.totalorder %s52, %s53
      %p62 = scmp.eq.s32.totalorder %s21, 0
      %p63 = por %p61, %p62
      %p64 = scmp.ne.s32.totalorder %s52, %s53
      %p65 = scmp.eq.s32.totalorder %s22, 1
      %p66 = por %p64, %p65
      %p68 = scmp.ne.s32.totalorder %s53, %s67
      %p69 = scmp.eq.s32.totalorder %s22, 0
      %p70 = por %p68, %p69
      %s72 = sadd.s32 %s71, 1
      %p75 = scmp.eq.s32.totalorder %s16, 1
      %p76 = scmp.ne.s32.totalorder %s71, %s73
      %p77 = scmp.eq.s32.totalorder %s16, 0
      %p78 = por %p76, %p77
      %p79 = scmp.ne.s32.totalorder %s71, %s73
      %p80 = scmp.eq.s32.totalorder %s21, 1
      %p81 = por %p79, %p80
      %p82 = scmp.ne.s32.totalorder %s73, %s74
      %p83 = scmp.eq.s32.totalorder %s21, 0
      %p84 = por %p82, %p83
      %p85 = scmp.ne.s32.totalorder %s73, %s74
      %p86 = scmp.eq.s32.totalorder %s22, 1
      %p87 = por %p85, %p86
      %p89 = scmp.ne.s32.totalorder %s74, %s88
      %p90 = scmp.eq.s32.totalorder %s22, 0
      %p91 = por %p89, %p90
      %s92 = ssub.s32 %s16, %s23
      %p93 = scmp.eq.s32.totalorder %s92, 0
      %s95 = sadd.s32 %s94, 1
      %s96 = scalar_select %p93, %s94, %s95
      %p99 = pneg %p93
      %p100 = scmp.eq.s32.totalorder %s16, 1
      %p101 = por %p99, %p100
      %p102 = scmp.ne.s32.totalorder %s94, %s97
      %p103 = scmp.eq.s32.totalorder %s16, 0
      %p104 = por %p102, %p103
      %p105 = scmp.ne.s32.totalorder %s94, %s97
      %p106 = scmp.eq.s32.totalorder %s21, 1
      %p107 = por %p105, %p106
      %p108 = scmp.ne.s32.totalorder %s97, %s98
      %p109 = scmp.eq.s32.totalorder %s21, 0
      %p110 = por %p108, %p109
      %p111 = scmp.ne.s32.totalorder %s97, %s98
      %p112 = scmp.eq.s32.totalorder %s22, 1
      %p113 = por %p111, %p112
      %p115 = scmp.ne.s32.totalorder %s98, %s114
      %p116 = scmp.eq.s32.totalorder %s22, 0
      %p117 = por %p115, %p116
      %p118 = scmp.le.s32.totalorder 1, %s16
      %p119 = scmp.lt.s32.totalorder %s16, 3
      %p120 = pnand %p118, %p119
      %p121 = pneg %p120
      // Predicated region
      $region9: #{tpu_custom_call.1} parent=5 // pred_check
        _
      $region10: #{tpu_custom_call.1} parent=5 // pred_check_branch
        %123 = sbr.rel (%p120) target = $region12
      $region11: #{tpu_custom_call.1} parent=5 // pred_region
        %s124 = ssub.s32 %s16, 1
        // Predicated region
        $region13: #{tpu_custom_call.1} parent=11 // pred_check
          %p125 = pneg %p63
        $region14: #{tpu_custom_call.1} parent=11 // pred_check_branch
          %127 = sbr.rel (%p125) target = $region16
        $region15: #{tpu_custom_call.1} parent=11 // pred_region
          %s129 = ssub.s32 9216, 9216
          %130 = vsyncadd [#allocation6], %s129
          %s131 = sshll.u32 [#allocation5], 4
          %s132 = int_to_ptr.vmem [resolvable:$true] %s131
          %137 = dma.hbm_to_vmem [thread:$0]  %s1, 9216, %s132, [#allocation6], 2304, 2304, 144
        $region16: #{tpu_custom_call.1} parent=11 // pred_fallthru
          _
        // Predicated region
        $region17: #{tpu_custom_call.1} parent=11 // pred_check
          %p138 = pneg %p84
        $region18: #{tpu_custom_call.1} parent=11 // pred_check_branch
          %140 = sbr.rel (%p138) target = $region20
        $region19: #{tpu_custom_call.1} parent=11 // pred_region
          %s142 = ssub.s32 128, 128
          %143 = vsyncadd [#allocation6], %s142
          %s145 = sshll.u32 [#allocation7], 4
          %s146 = int_to_ptr.vmem [resolvable:$true] %s145
          %148 = dma.hbm_to_vmem [thread:$0]  %s2, 128, %s146, [#allocation6]
        $region20: #{tpu_custom_call.1} parent=11 // pred_fallthru
          _
      $region12: #{tpu_custom_call.1} parent=5 // pred_fallthru
        _
      %p149 = scmp.lt.s32.totalorder %s16, 2
      // Predicated region
      $region21: #{tpu_custom_call.1} parent=5 // pred_check
        %p150 = pneg %p149
      $region22: #{tpu_custom_call.1} parent=5 // pred_check_branch
        %152 = sbr.rel (%p150) target = $region24
      $region23: #{tpu_custom_call.1} parent=5 // pred_region
        // Predicated region
        $region25: #{tpu_custom_call.1} parent=23 // pred_check
          %p153 = pneg %p36
        $region26: #{tpu_custom_call.1} parent=23 // pred_check_branch
          %155 = sbr.rel (%p153) target = $region28
        $region27: #{tpu_custom_call.1} parent=23 // pred_region
          %s156 = sand.u32 %s26, 1
          %s157 = scalar_lea.sflag [#allocation3], %s156
          %s158 = sand.u32 %s26, 1
          %s159 = smul.addr %s158, 64
          %s160 = scalar_lea.vmem [#allocation2], %s159
          %s161 = smul.u32 8, %s16
          %s163 = ssub.s32 1024, 1024
          %164 = vsyncadd %s157, %s163
          %s165 = smul.addr %s161, 128
          %s166 = scalar_lea.hbm %s0, %s165
          %s167 = sshll.u32 %s160, 4
          %s168 = int_to_ptr.vmem [resolvable:$true] %s167
          %173 = dma.hbm_to_vmem [thread:$0]  %s166, 1024, %s168, %s157, 128, 128, 8
        $region28: #{tpu_custom_call.1} parent=23 // pred_fallthru
          _
      $region24: #{tpu_custom_call.1} parent=5 // pred_fallthru
        _
      %p174 = scmp.le.s32.totalorder 1, %s16
      %p175 = scmp.lt.s32.totalorder %s16, 3
      %p176 = pnand %p174, %p175
      %p177 = pneg %p176
      // Predicated region
      $region29: #{tpu_custom_call.1} parent=5 // pred_check
        _
      $region30: #{tpu_custom_call.1} parent=5 // pred_check_branch
        %179 = sbr.rel (%p176) target = $region32
      $region31: #{tpu_custom_call.1} parent=5 // pred_region
        %s180 = ssub.s32 %s16, 1
        %s181 = sand.u32 %s29, 1
        %s182 = scalar_lea.sflag [#allocation3], %s181
        %s183 = sand.u32 %s29, 1
        %s184 = smul.addr %s183, 64
        %s185 = scalar_lea.vmem [#allocation2], %s184
        // Predicated region
        $region33: #{tpu_custom_call.1} parent=31 // pred_check
          %p186 = pneg %p42
        $region34: #{tpu_custom_call.1} parent=31 // pred_check_branch
          %188 = sbr.rel (%p186) target = $region36
        $region35: #{tpu_custom_call.1} parent=31 // pred_region
          %189 = dma.done %s182, 1024
        $region36: #{tpu_custom_call.1} parent=31 // pred_fallthru
          _
        // Predicated region
        $region37: #{tpu_custom_call.1} parent=31 // pred_check
          %p190 = pneg %p63
        $region38: #{tpu_custom_call.1} parent=31 // pred_check_branch
          %192 = sbr.rel (%p190) target = $region40
        $region39: #{tpu_custom_call.1} parent=31 // pred_region
          %193 = dma.done [#allocation6], 9216
        $region40: #{tpu_custom_call.1} parent=31 // pred_fallthru
          _
        // Predicated region
        $region41: #{tpu_custom_call.1} parent=31 // pred_check
          %p194 = pneg %p84
        $region42: #{tpu_custom_call.1} parent=31 // pred_check_branch
          %196 = sbr.rel (%p194) target = $region44
        $region43: #{tpu_custom_call.1} parent=31 // pred_region
          %197 = dma.done [#allocation6], 128
        $region44: #{tpu_custom_call.1} parent=31 // pred_fallthru
          _
        %s198 = sand.u32 %s29, 1
        %s199 = scalar_lea.sflag [#allocation3], %s198
        %s200 = sand.u32 %s29, 1
        %s201 = smul.addr %s200, 64
        %s202 = scalar_lea.vmem [#allocation2], %s201
        %p203 = pneg %p42
        %p204 = pneg %p39
        %p205 = pneg %p63
        %p206 = pneg %p60
        %p207 = pneg %p84
        %p208 = pneg %p81
        %p209 = pneg %p110
        %p210 = pneg %p107
        %s211 = sand.u32 %s97, 1
        %s212 = scalar_lea.sflag [#allocation4], %s211
        %s213 = sand.u32 %s97, 1
        %s214 = smul.addr %s213, 64
        %s215 = scalar_lea.vmem [#allocation8], %s214
        %s216 = smul.u32 8, %s21
        %v217 = vld [vmem:[%s185] sm:$0xff]
        %v218 = vld [vmem:[%s185 + $0x8] sm:$0xff]
        %v219 = vld [vmem:[%s185 + $0x10] sm:$0xff]
        %v220 = vld [vmem:[%s185 + $0x18] sm:$0xff]
        %v221 = vld [vmem:[%s185 + $0x20] sm:$0xff]
        %v222 = vld [vmem:[%s185 + $0x28] sm:$0xff]
        %v223 = vld [vmem:[%s185 + $0x30] sm:$0xff]
        %v224 = vld [vmem:[%s185 + $0x38] sm:$0xff]
        %v225 = vld [vmem:[#allocation5] sm:$0xff]
        %v226 = vld [vmem:[#allocation5 + $0x8] sm:$0xff]
        %v227 = vld [vmem:[#allocation5 + $0x10] sm:$0xff]
        %v228 = vld [vmem:[#allocation5 + $0x18] sm:$0xff]
        %v229 = vld [vmem:[#allocation5 + $0x20] sm:$0xff]
        %v230 = vld [vmem:[#allocation5 + $0x28] sm:$0xff]
        %v231 = vld [vmem:[#allocation5 + $0x30] sm:$0xff]
        %v232 = vld [vmem:[#allocation5 + $0x38] sm:$0xff]
        %v233 = vld [vmem:[#allocation5 + $0x40] sm:$0xff]
        %v234 = vld [vmem:[#allocation5 + $0x48] sm:$0xff]
        %v235 = vld [vmem:[#allocation5 + $0x50] sm:$0xff]
        %v236 = vld [vmem:[#allocation5 + $0x58] sm:$0xff]
        %v237 = vld [vmem:[#allocation5 + $0x60] sm:$0xff]
        %v238 = vld [vmem:[#allocation5 + $0x68] sm:$0xff]
        %v239 = vld [vmem:[#allocation5 + $0x70] sm:$0xff]
        %v240 = vld [vmem:[#allocation5 + $0x78] sm:$0xff]
        %v241 = vld [vmem:[#allocation5 + $0x80] sm:$0xff]
        %v242 = vld [vmem:[#allocation5 + $0x88] sm:$0xff]
        %v243 = vld [vmem:[#allocation5 + $0x90] sm:$0xff]
        %v244 = vld [vmem:[#allocation5 + $0x98] sm:$0xff]
        %v245 = vld [vmem:[#allocation5 + $0xa0] sm:$0xff]
        %v246 = vld [vmem:[#allocation5 + $0xa8] sm:$0xff]
        %v247 = vld [vmem:[#allocation5 + $0xb0] sm:$0xff]
        %v248 = vld [vmem:[#allocation5 + $0xb8] sm:$0xff]
        %v249 = vld [vmem:[#allocation5 + $0xc0] sm:$0xff]
        %v250 = vld [vmem:[#allocation5 + $0xc8] sm:$0xff]
        %v251 = vld [vmem:[#allocation5 + $0xd0] sm:$0xff]
        %v252 = vld [vmem:[#allocation5 + $0xd8] sm:$0xff]
        %v253 = vld [vmem:[#allocation5 + $0xe0] sm:$0xff]
        %v254 = vld [vmem:[#allocation5 + $0xe8] sm:$0xff]
        %v255 = vld [vmem:[#allocation5 + $0xf0] sm:$0xff]
        %v256 = vld [vmem:[#allocation5 + $0xf8] sm:$0xff]
        %v257 = vld [vmem:[#allocation5 + $0x100] sm:$0xff]
        %v258 = vld [vmem:[#allocation5 + $0x108] sm:$0xff]
        %v259 = vld [vmem:[#allocation5 + $0x110] sm:$0xff]
        %v260 = vld [vmem:[#allocation5 + $0x118] sm:$0xff]
        %v261 = vld [vmem:[#allocation5 + $0x120] sm:$0xff]
        %v262 = vld [vmem:[#allocation5 + $0x128] sm:$0xff]
        %v263 = vld [vmem:[#allocation5 + $0x130] sm:$0xff]
        %v264 = vld [vmem:[#allocation5 + $0x138] sm:$0xff]
        %v265 = vld [vmem:[#allocation5 + $0x140] sm:$0xff]
        %v266 = vld [vmem:[#allocation5 + $0x148] sm:$0xff]
        %v267 = vld [vmem:[#allocation5 + $0x150] sm:$0xff]
        %v268 = vld [vmem:[#allocation5 + $0x158] sm:$0xff]
        %v269 = vld [vmem:[#allocation5 + $0x160] sm:$0xff]
        %v270 = vld [vmem:[#allocation5 + $0x168] sm:$0xff]
        %v271 = vld [vmem:[#allocation5 + $0x170] sm:$0xff]
        %v272 = vld [vmem:[#allocation5 + $0x178] sm:$0xff]
        %v273 = vld [vmem:[#allocation5 + $0x180] sm:$0xff]
        %v274 = vld [vmem:[#allocation5 + $0x188] sm:$0xff]
        %v275 = vld [vmem:[#allocation5 + $0x190] sm:$0xff]
        %v276 = vld [vmem:[#allocation5 + $0x198] sm:$0xff]
        %v277 = vld [vmem:[#allocation5 + $0x1a0] sm:$0xff]
        %v278 = vld [vmem:[#allocation5 + $0x1a8] sm:$0xff]
        %v279 = vld [vmem:[#allocation5 + $0x1b0] sm:$0xff]
        %v280 = vld [vmem:[#allocation5 + $0x1b8] sm:$0xff]
        %v281 = vld [vmem:[#allocation5 + $0x1c0] sm:$0xff]
        %v282 = vld [vmem:[#allocation5 + $0x1c8] sm:$0xff]
        %v283 = vld [vmem:[#allocation5 + $0x1d0] sm:$0xff]
        %v284 = vld [vmem:[#allocation5 + $0x1d8] sm:$0xff]
        %v285 = vld [vmem:[#allocation5 + $0x1e0] sm:$0xff]
        %v286 = vld [vmem:[#allocation5 + $0x1e8] sm:$0xff]
        %v287 = vld [vmem:[#allocation5 + $0x1f0] sm:$0xff]
        %v288 = vld [vmem:[#allocation5 + $0x1f8] sm:$0xff]
        %v289 = vld [vmem:[#allocation5 + $0x200] sm:$0xff]
        %v290 = vld [vmem:[#allocation5 + $0x208] sm:$0xff]
        %v291 = vld [vmem:[#allocation5 + $0x210] sm:$0xff]
        %v292 = vld [vmem:[#allocation5 + $0x218] sm:$0xff]
        %v293 = vld [vmem:[#allocation5 + $0x220] sm:$0xff]
        %v294 = vld [vmem:[#allocation5 + $0x228] sm:$0xff]
        %v295 = vld [vmem:[#allocation5 + $0x230] sm:$0xff]
        %v296 = vld [vmem:[#allocation5 + $0x238] sm:$0xff]
        %vm297 = vcmask 261120
        %v299 = vsel %vm297, %v217, 0
        %v302 = vsel %vm297, %v218, 0
        %v305 = vsel %vm297, %v219, 0
        %v308 = vsel %vm297, %v220, 0
        %v311 = vsel %vm297, %v221, 0
        %v314 = vsel %vm297, %v222, 0
        %v317 = vsel %vm297, %v223, 0
        %v320 = vsel %vm297, %v224, 0
        %322 = vmatprep.subr.mxu0 %v226
        %323 = vmatpush1.msra.mxu0 %v225
        %324 = vmatprep.subr.mxu0 %v244
        %325 = vmatpush1.msra.mxu0 %v243
        %326 = vmatprep.subr.mxu0 %v262
        %327 = vmatpush1.msra.mxu0 %v261
        %328 = vmatprep.subr.mxu0 %v280
        %329 = vmatpush1.msra.mxu0 %v279
        %330 = vmatprep.subr.mxu0 0.0
        %331 = vmatpush1.msra.mxu0 0.0
        %332 = vmatprep.subr.mxu0 0.0
        %333 = vmatpush1.msra.mxu0 0.0
        %334 = vmatprep.subr.mxu0 0.0
        %335 = vmatpush1.msra.mxu0 0.0
        %336 = vmatprep.subr.mxu0 0.0
        %337 = vmatpush1.msra.mxu0 0.0
        %338 = vmatprep.subr.mxu0 0.0
        %339 = vmatpush1.msra.mxu0 0.0
        %340 = vmatprep.subr.mxu0 0.0
        %341 = vmatpush1.msra.mxu0 0.0
        %342 = vmatprep.subr.mxu0 0.0
        %343 = vmatpush1.msra.mxu0 0.0
        %344 = vmatprep.subr.mxu0 0.0
        %345 = vmatpush1.msra.mxu0 0.0
        %346 = vmatprep.subr.mxu0 0.0
        %347 = vmatpush1.msra.mxu0 0.0
        %348 = vmatprep.subr.mxu0 0.0
        %349 = vmatpush1.msra.mxu0 0.0
        %350 = vmatprep.subr.mxu0 0.0
        %351 = vmatpush1.msra.mxu0 0.0
        %352 = vmatprep.subr.mxu0 0.0
        %353 = vmatpush1.msra.mxu0 0.0
        %354 = vmatprep.subr.mxu0 0.0
        %355 = vmatpush1.msra.mxu0 0.0
        %356 = vmatprep.subr.mxu0 0.0
        %357 = vmatpush1.msra.mxu0 0.0
        %358 = vmatprep.subr.mxu0 0.0
        %359 = vmatpush1.msra.mxu0 0.0
        %360 = vmatprep.subr.mxu0 0.0
        %361 = vmatpush1.msra.mxu0 0.0
        %362 = vmatprep.subr.mxu0 0.0
        %363 = vmatpush1.msra.mxu0 0.0
        %364 = vmatprep.subr.mxu0 0.0
        %365 = vmatpush1.msra.mxu0 0.0
        %366 = vmatprep.subr.mxu0 0.0
        %367 = vmatpush1.msra.mxu0 0.0
        %368 = vmatprep.subr.mxu0 0.0
        %369 = vmatpush1.msra.mxu0 0.0
        %370 = vmatprep.subr.mxu0 0.0
        %371 = vmatpush1.msra.mxu0 0.0
        %372 = vmatprep.subr.mxu0 0.0
        %373 = vmatpush1.msra.mxu0 0.0
        %374 = vmatprep.subr.mxu0 0.0
        %375 = vmatpush1.msra.mxu0 0.0
        %376 = vmatprep.subr.mxu0 0.0
        %377 = vmatpush1.msra.mxu0 0.0
        %378 = vmatprep.subr.mxu0 0.0
        %379 = vmatpush1.msra.mxu0 0.0
        %380 = vmatprep.subr.mxu0 0.0
        %381 = vmatpush1.msra.mxu0 0.0
        %382 = vmatprep.subr.mxu0 0.0
        %383 = vmatpush1.msra.mxu0 0.0
        %384 = vmatprep.subr.mxu0 0.0
        %385 = vmatpush1.msra.mxu0 0.0
        %386 = vmatprep.mubr.f32.mxu0 0.0
        %387 = vmatmul.mubr.f32.gmra.mrb[0].mxu0 %v299
        %v388 = vpop.f32.mrb[0].mxu0
        %v389 = vadd.f32 0.0, %v388
        %v390 = vpop.f32.mrb[0].mxu0
        %v391 = vadd.f32 0.0, %v390
        %392 = vmatprep.mubr.f32.mxu0 0.0
        %393 = vmatmul.mubr.f32.gmra.mrb[0].mxu0 %v302
        %v394 = vpop.f32.mrb[0].mxu0
        %v395 = vadd.f32 0.0, %v394
        %v396 = vpop.f32.mrb[0].mxu0
        %v397 = vadd.f32 0.0, %v396
        %398 = vmatprep.mubr.f32.mxu0 0.0
        %399 = vmatmul.mubr.f32.gmra.mrb[0].mxu0 %v305
        %v400 = vpop.f32.mrb[0].mxu0
        %v401 = vadd.f32 0.0, %v400
        %v402 = vpop.f32.mrb[0].mxu0
        %v403 = vadd.f32 0.0, %v402
        %404 = vmatprep.mubr.f32.mxu0 0.0
        %405 = vmatmul.mubr.f32.gmra.mrb[0].mxu0 %v308
        %v406 = vpop.f32.mrb[0].mxu0
        %v407 = vadd.f32 0.0, %v406
        %v408 = vpop.f32.mrb[0].mxu0
        %v409 = vadd.f32 0.0, %v408
        %410 = vmatprep.mubr.f32.mxu0 0.0
        %411 = vmatmul.mubr.f32.gmra.mrb[0].mxu0 %v311
        %v412 = vpop.f32.mrb[0].mxu0
        %v413 = vadd.f32 0.0, %v412
        %v414 = vpop.f32.mrb[0].mxu0
        %v415 = vadd.f32 0.0, %v414
        %416 = vmatprep.mubr.f32.mxu0 0.0
        %417 = vmatmul.mubr.f32.gmra.mrb[0].mxu0 %v314
        %v418 = vpop.f32.mrb[0].mxu0
        %v419 = vadd.f32 0.0, %v418
        %v420 = vpop.f32.mrb[0].mxu0
        %v421 = vadd.f32 0.0, %v420
        %422 = vmatprep.mubr.f32.mxu0 0.0
        %423 = vmatmul.mubr.f32.gmra.mrb[0].mxu0 %v317
        %v424 = vpop.f32.mrb[0].mxu0
        %v425 = vadd.f32 0.0, %v424
        %v426 = vpop.f32.mrb[0].mxu0
        %v427 = vadd.f32 0.0, %v426
        %428 = vmatprep.mubr.f32.mxu0 0.0
        %429 = vmatmul.mubr.f32.gmra.mrb[0].mxu0 %v320
        %v430 = vpop.f32.mrb[0].mxu0
        %v431 = vadd.f32 0.0, %v430
        %v432 = vpop.f32.mrb[0].mxu0
        %v433 = vadd.f32 0.0, %v432
        %434 = vdwg.mxu0
        %435 = vmatprep.subr.mxu0 %v228
        %436 = vmatpush1.msra.mxu0 %v227
        %437 = vmatprep.subr.mxu0 %v246
        %438 = vmatpush1.msra.mxu0 %v245
        %439 = vmatprep.subr.mxu0 %v264
        %440 = vmatpush1.msra.mxu0 %v263
        %441 = vmatprep.subr.mxu0 %v282
        %442 = vmatpush1.msra.mxu0 %v281
        %443 = vmatprep.subr.mxu0 0.0
        %444 = vmatpush1.msra.mxu0 0.0
        %445 = vmatprep.subr.mxu0 0.0
        %446 = vmatpush1.msra.mxu0 0.0
        %447 = vmatprep.subr.mxu0 0.0
        %448 = vmatpush1.msra.mxu0 0.0
        %449 = vmatprep.subr.mxu0 0.0
        %450 = vmatpush1.msra.mxu0 0.0
        %451 = vmatprep.subr.mxu0 0.0
        %452 = vmatpush1.msra.mxu0 0.0
        %453 = vmatprep.subr.mxu0 0.0
        %454 = vmatpush1.msra.mxu0 0.0
        %455 = vmatprep.subr.mxu0 0.0
        %456 = vmatpush1.msra.mxu0 0.0
        %457 = vmatprep.subr.mxu0 0.0
        %458 = vmatpush1.msra.mxu0 0.0
        %459 = vmatprep.subr.mxu0 0.0
        %460 = vmatpush1.msra.mxu0 0.0
        %461 = vmatprep.subr.mxu0 0.0
        %462 = vmatpush1.msra.mxu0 0.0
        %463 = vmatprep.subr.mxu0 0.0
        %464 = vmatpush1.msra.mxu0 0.0
        %465 = vmatprep.subr.mxu0 0.0
        %466 = vmatpush1.msra.mxu0 0.0
        %467 = vmatprep.subr.mxu0 0.0
        %468 = vmatpush1.msra.mxu0 0.0
        %469 = vmatprep.subr.mxu0 0.0
        %470 = vmatpush1.msra.mxu0 0.0
        %471 = vmatprep.subr.mxu0 0.0
        %472 = vmatpush1.msra.mxu0 0.0
        %473 = vmatprep.subr.mxu0 0.0
        %474 = vmatpush1.msra.mxu0 0.0
        %475 = vmatprep.subr.mxu0 0.0
        %476 = vmatpush1.msra.mxu0 0.0
        %477 = vmatprep.subr.mxu0 0.0
        %478 = vmatpush1.msra.mxu0 0.0
        %479 = vmatprep.subr.mxu0 0.0
        %480 = vmatpush1.msra.mxu0 0.0
        %481 = vmatprep.subr.mxu0 0.0
        %482 = vmatpush1.msra.mxu0 0.0
        %483 = vmatprep.subr.mxu0 0.0
        %484 = vmatpush1.msra.mxu0 0.0
        %485 = vmatprep.subr.mxu0 0.0
        %486 = vmatpush1.msra.mxu0 0.0
        %487 = vmatprep.subr.mxu0 0.0
        %488 = vmatpush1.msra.mxu0 0.0
        %489 = vmatprep.subr.mxu0 0.0
        %490 = vmatpush1.msra.mxu0 0.0
        %491 = vmatprep.subr.mxu0 0.0
        %492 = vmatpush1.msra.mxu0 0.0
        %493 = vmatprep.subr.mxu0 0.0
        %494 = vmatpush1.msra.mxu0 0.0
        %495 = vmatprep.subr.mxu0 0.0
        %496 = vmatpush1.msra.mxu0 0.0
        %497 = vmatprep.subr.mxu0 0.0
        %498 = vmatpush1.msra.mxu0 0.0
        %499 = vmatprep.mubr.f32.mxu0 0.0
        %500 = vmatmul.mubr.f32.gmra.mrb[0].mxu0 %v299
        %v501 = vpop.f32.mrb[0].mxu0
        %v502 = vadd.f32 0.0, %v501
        %v503 = vpop.f32.mrb[0].mxu0
        %v504 = vadd.f32 0.0, %v503
        %505 = vmatprep.mubr.f32.mxu0 0.0
        %506 = vmatmul.mubr.f32.gmra.mrb[0].mxu0 %v302
        %v507 = vpop.f32.mrb[0].mxu0
        %v508 = vadd.f32 0.0, %v507
        %v509 = vpop.f32.mrb[0].mxu0
        %v510 = vadd.f32 0.0, %v509
        %511 = vmatprep.mubr.f32.mxu0 0.0
        %512 = vmatmul.mubr.f32.gmra.mrb[0].mxu0 %v305
        %v513 = vpop.f32.mrb[0].mxu0
        %v514 = vadd.f32 0.0, %v513
        %v515 = vpop.f32.mrb[0].mxu0
        %v516 = vadd.f32 0.0, %v515
        %517 = vmatprep.mubr.f32.mxu0 0.0
        %518 = vmatmul.mubr.f32.gmra.mrb[0].mxu0 %v308
        %v519 = vpop.f32.mrb[0].mxu0
        %v520 = vadd.f32 0.0, %v519
        %v521 = vpop.f32.mrb[0].mxu0
        %v522 = vadd.f32 0.0, %v521
        %523 = vmatprep.mubr.f32.mxu0 0.0
        %524 = vmatmul.mubr.f32.gmra.mrb[0].mxu0 %v311
        %v525 = vpop.f32.mrb[0].mxu0
        %v526 = vadd.f32 0.0, %v525
        %v527 = vpop.f32.mrb[0].mxu0
        %v528 = vadd.f32 0.0, %v527
        %529 = vmatprep.mubr.f32.mxu0 0.0
        %530 = vmatmul.mubr.f32.gmra.mrb[0].mxu0 %v314
        %v531 = vpop.f32.mrb[0].mxu0
        %v532 = vadd.f32 0.0, %v531
        %v533 = vpop.f32.mrb[0].mxu0
        %v534 = vadd.f32 0.0, %v533
        %535 = vmatprep.mubr.f32.mxu0 0.0
        %536 = vmatmul.mubr.f32.gmra.mrb[0].mxu0 %v317
        %v537 = vpop.f32.mrb[0].mxu0
        %v538 = vadd.f32 0.0, %v537
        %v539 = vpop.f32.mrb[0].mxu0
        %v540 = vadd.f32 0.0, %v539
        %541 = vmatprep.mubr.f32.mxu0 0.0
        %542 = vmatmul.mubr.f32.gmra.mrb[0].mxu0 %v320
        %v543 = vpop.f32.mrb[0].mxu0
        %v544 = vadd.f32 0.0, %v543
        %v545 = vpop.f32.mrb[0].mxu0
        %v546 = vadd.f32 0.0, %v545
        %547 = vdwg.mxu0
        %548 = vmatprep.subr.mxu0 %v230
        %549 = vmatpush1.msra.mxu0 %v229
        %550 = vmatprep.subr.mxu0 %v248
        %551 = vmatpush1.msra.mxu0 %v247
        %552 = vmatprep.subr.mxu0 %v266
        %553 = vmatpush1.msra.mxu0 %v265
        %554 = vmatprep.subr.mxu0 %v284
        %555 = vmatpush1.msra.mxu0 %v283
        %556 = vmatprep.subr.mxu0 0.0
        %557 = vmatpush1.msra.mxu0 0.0
        %558 = vmatprep.subr.mxu0 0.0
        %559 = vmatpush1.msra.mxu0 0.0
        %560 = vmatprep.subr.mxu0 0.0
        %561 = vmatpush1.msra.mxu0 0.0
        %562 = vmatprep.subr.mxu0 0.0
        %563 = vmatpush1.msra.mxu0 0.0
        %564 = vmatprep.subr.mxu0 0.0
        %565 = vmatpush1.msra.mxu0 0.0
        %566 = vmatprep.subr.mxu0 0.0
        %567 = vmatpush1.msra.mxu0 0.0
        %568 = vmatprep.subr.mxu0 0.0
        %569 = vmatpush1.msra.mxu0 0.0
        %570 = vmatprep.subr.mxu0 0.0
        %571 = vmatpush1.msra.mxu0 0.0
        %572 = vmatprep.subr.mxu0 0.0
        %573 = vmatpush1.msra.mxu0 0.0
        %574 = vmatprep.subr.mxu0 0.0
        %575 = vmatpush1.msra.mxu0 0.0
        %576 = vmatprep.subr.mxu0 0.0
        %577 = vmatpush1.msra.mxu0 0.0
        %578 = vmatprep.subr.mxu0 0.0
        %579 = vmatpush1.msra.mxu0 0.0
        %580 = vmatprep.subr.mxu0 0.0
        %581 = vmatpush1.msra.mxu0 0.0
        %582 = vmatprep.subr.mxu0 0.0
        %583 = vmatpush1.msra.mxu0 0.0
        %584 = vmatprep.subr.mxu0 0.0
        %585 = vmatpush1.msra.mxu0 0.0
        %586 = vmatprep.subr.mxu0 0.0
        %587 = vmatpush1.msra.mxu0 0.0
        %588 = vmatprep.subr.mxu0 0.0
        %589 = vmatpush1.msra.mxu0 0.0
        %590 = vmatprep.subr.mxu0 0.0
        %591 = vmatpush1.msra.mxu0 0.0
        %592 = vmatprep.subr.mxu0 0.0
        %593 = vmatpush1.msra.mxu0 0.0
        %594 = vmatprep.subr.mxu0 0.0
        %595 = vmatpush1.msra.mxu0 0.0
        %596 = vmatprep.subr.mxu0 0.0
        %597 = vmatpush1.msra.mxu0 0.0
        %598 = vmatprep.subr.mxu0 0.0
        %599 = vmatpush1.msra.mxu0 0.0
        %600 = vmatprep.subr.mxu0 0.0
        %601 = vmatpush1.msra.mxu0 0.0
        %602 = vmatprep.subr.mxu0 0.0
        %603 = vmatpush1.msra.mxu0 0.0
        %604 = vmatprep.subr.mxu0 0.0
        %605 = vmatpush1.msra.mxu0 0.0
        %606 = vmatprep.subr.mxu0 0.0
        %607 = vmatpush1.msra.mxu0 0.0
        %608 = vmatprep.subr.mxu0 0.0
        %609 = vmatpush1.msra.mxu0 0.0
        %610 = vmatprep.subr.mxu0 0.0
        %611 = vmatpush1.msra.mxu0 0.0
        %612 = vmatprep.mubr.f32.mxu0 0.0
        %613 = vmatmul.mubr.f32.gmra.mrb[0].mxu0 %v299
        %v614 = vpop.f32.mrb[0].mxu0
        %v615 = vadd.f32 0.0, %v614
        %v616 = vpop.f32.mrb[0].mxu0
        %v617 = vadd.f32 0.0, %v616
        %618 = vmatprep.mubr.f32.mxu0 0.0
        %619 = vmatmul.mubr.f32.gmra.mrb[0].mxu0 %v302
        %v620 = vpop.f32.mrb[0].mxu0
        %v621 = vadd.f32 0.0, %v620
        %v622 = vpop.f32.mrb[0].mxu0
        %v623 = vadd.f32 0.0, %v622
        %624 = vmatprep.mubr.f32.mxu0 0.0
        %625 = vmatmul.mubr.f32.gmra.mrb[0].mxu0 %v305
        %v626 = vpop.f32.mrb[0].mxu0
        %v627 = vadd.f32 0.0, %v626
        %v628 = vpop.f32.mrb[0].mxu0
        %v629 = vadd.f32 0.0, %v628
        %630 = vmatprep.mubr.f32.mxu0 0.0
        %631 = vmatmul.mubr.f32.gmra.mrb[0].mxu0 %v308
        %v632 = vpop.f32.mrb[0].mxu0
        %v633 = vadd.f32 0.0, %v632
        %v634 = vpop.f32.mrb[0].mxu0
        %v635 = vadd.f32 0.0, %v634
        %636 = vmatprep.mubr.f32.mxu0 0.0
        %637 = vmatmul.mubr.f32.gmra.mrb[0].mxu0 %v311
        %v638 = vpop.f32.mrb[0].mxu0
        %v639 = vadd.f32 0.0, %v638
        %v640 = vpop.f32.mrb[0].mxu0
        %v641 = vadd.f32 0.0, %v640
        %642 = vmatprep.mubr.f32.mxu0 0.0
        %643 = vmatmul.mubr.f32.gmra.mrb[0].mxu0 %v314
        %v644 = vpop.f32.mrb[0].mxu0
        %v645 = vadd.f32 0.0, %v644
        %v646 = vpop.f32.mrb[0].mxu0
        %v647 = vadd.f32 0.0, %v646
        %648 = vmatprep.mubr.f32.mxu0 0.0
        %649 = vmatmul.mubr.f32.gmra.mrb[0].mxu0 %v317
        %v650 = vpop.f32.mrb[0].mxu0
        %v651 = vadd.f32 0.0, %v650
        %v652 = vpop.f32.mrb[0].mxu0
        %v653 = vadd.f32 0.0, %v652
        %654 = vmatprep.mubr.f32.mxu0 0.0
        %655 = vmatmul.mubr.f32.gmra.mrb[0].mxu0 %v320
        %v656 = vpop.f32.mrb[0].mxu0
        %v657 = vadd.f32 0.0, %v656
        %v658 = vpop.f32.mrb[0].mxu0
        %v659 = vadd.f32 0.0, %v658
        %660 = vdwg.mxu0
        %661 = vmatprep.subr.mxu0 %v232
        %662 = vmatpush1.msra.mxu0 %v231
        %663 = vmatprep.subr.mxu0 %v250
        %664 = vmatpush1.msra.mxu0 %v249
        %665 = vmatprep.subr.mxu0 %v268
        %666 = vmatpush1.msra.mxu0 %v267
        %667 = vmatprep.subr.mxu0 %v286
        %668 = vmatpush1.msra.mxu0 %v285
        %669 = vmatprep.subr.mxu0 0.0
        %670 = vmatpush1.msra.mxu0 0.0
        %671 = vmatprep.subr.mxu0 0.0
        %672 = vmatpush1.msra.mxu0 0.0
        %673 = vmatprep.subr.mxu0 0.0
        %674 = vmatpush1.msra.mxu0 0.0
        %675 = vmatprep.subr.mxu0 0.0
        %676 = vmatpush1.msra.mxu0 0.0
        %677 = vmatprep.subr.mxu0 0.0
        %678 = vmatpush1.msra.mxu0 0.0
        %679 = vmatprep.subr.mxu0 0.0
        %680 = vmatpush1.msra.mxu0 0.0
        %681 = vmatprep.subr.mxu0 0.0
        %682 = vmatpush1.msra.mxu0 0.0
        %683 = vmatprep.subr.mxu0 0.0
        %684 = vmatpush1.msra.mxu0 0.0
        %685 = vmatprep.subr.mxu0 0.0
        %686 = vmatpush1.msra.mxu0 0.0
        %687 = vmatprep.subr.mxu0 0.0
        %688 = vmatpush1.msra.mxu0 0.0
        %689 = vmatprep.subr.mxu0 0.0
        %690 = vmatpush1.msra.mxu0 0.0
        %691 = vmatprep.subr.mxu0 0.0
        %692 = vmatpush1.msra.mxu0 0.0
        %693 = vmatprep.subr.mxu0 0.0
        %694 = vmatpush1.msra.mxu0 0.0
        %695 = vmatprep.subr.mxu0 0.0
        %696 = vmatpush1.msra.mxu0 0.0
        %697 = vmatprep.subr.mxu0 0.0
        %698 = vmatpush1.msra.mxu0 0.0
        %699 = vmatprep.subr.mxu0 0.0
        %700 = vmatpush1.msra.mxu0 0.0
        %701 = vmatprep.subr.mxu0 0.0
        %702 = vmatpush1.msra.mxu0 0.0
        %703 = vmatprep.subr.mxu0 0.0
        %704 = vmatpush1.msra.mxu0 0.0
        %705 = vmatprep.subr.mxu0 0.0
        %706 = vmatpush1.msra.mxu0 0.0
        %707 = vmatprep.subr.mxu0 0.0
        %708 = vmatpush1.msra.mxu0 0.0
        %709 = vmatprep.subr.mxu0 0.0
        %710 = vmatpush1.msra.mxu0 0.0
        %711 = vmatprep.subr.mxu0 0.0
        %712 = vmatpush1.msra.mxu0 0.0
        %713 = vmatprep.subr.mxu0 0.0
        %714 = vmatpush1.msra.mxu0 0.0
        %715 = vmatprep.subr.mxu0 0.0
        %716 = vmatpush1.msra.mxu0 0.0
        %717 = vmatprep.subr.mxu0 0.0
        %718 = vmatpush1.msra.mxu0 0.0
        %719 = vmatprep.subr.mxu0 0.0
        %720 = vmatpush1.msra.mxu0 0.0
        %721 = vmatprep.subr.mxu0 0.0
        %722 = vmatpush1.msra.mxu0 0.0
        %723 = vmatprep.subr.mxu0 0.0
        %724 = vmatpush1.msra.mxu0 0.0
        %725 = vmatprep.mubr.f32.mxu0 0.0
        %726 = vmatmul.mubr.f32.gmra.mrb[0].mxu0 %v299
        %v727 = vpop.f32.mrb[0].mxu0
        %v728 = vadd.f32 0.0, %v727
        %v729 = vpop.f32.mrb[0].mxu0
        %v730 = vadd.f32 0.0, %v729
        %731 = vmatprep.mubr.f32.mxu0 0.0
        %732 = vmatmul.mubr.f32.gmra.mrb[0].mxu0 %v302
        %v733 = vpop.f32.mrb[0].mxu0
        %v734 = vadd.f32 0.0, %v733
        %v735 = vpop.f32.mrb[0].mxu0
        %v736 = vadd.f32 0.0, %v735
        %737 = vmatprep.mubr.f32.mxu0 0.0
        %738 = vmatmul.mubr.f32.gmra.mrb[0].mxu0 %v305
        %v739 = vpop.f32.mrb[0].mxu0
        %v740 = vadd.f32 0.0, %v739
        %v741 = vpop.f32.mrb[0].mxu0
        %v742 = vadd.f32 0.0, %v741
        %743 = vmatprep.mubr.f32.mxu0 0.0
        %744 = vmatmul.mubr.f32.gmra.mrb[0].mxu0 %v308
        %v745 = vpop.f32.mrb[0].mxu0
        %v746 = vadd.f32 0.0, %v745
        %v747 = vpop.f32.mrb[0].mxu0
        %v748 = vadd.f32 0.0, %v747
        %749 = vmatprep.mubr.f32.mxu0 0.0
        %750 = vmatmul.mubr.f32.gmra.mrb[0].mxu0 %v311
        %v751 = vpop.f32.mrb[0].mxu0
        %v752 = vadd.f32 0.0, %v751
        %v753 = vpop.f32.mrb[0].mxu0
        %v754 = vadd.f32 0.0, %v753
        %755 = vmatprep.mubr.f32.mxu0 0.0
        %756 = vmatmul.mubr.f32.gmra.mrb[0].mxu0 %v314
        %v757 = vpop.f32.mrb[0].mxu0
        %v758 = vadd.f32 0.0, %v757
        %v759 = vpop.f32.mrb[0].mxu0
        %v760 = vadd.f32 0.0, %v759
        %761 = vmatprep.mubr.f32.mxu0 0.0
        %762 = vmatmul.mubr.f32.gmra.mrb[0].mxu0 %v317
        %v763 = vpop.f32.mrb[0].mxu0
        %v764 = vadd.f32 0.0, %v763
        %v765 = vpop.f32.mrb[0].mxu0
        %v766 = vadd.f32 0.0, %v765
        %767 = vmatprep.mubr.f32.mxu0 0.0
        %768 = vmatmul.mubr.f32.gmra.mrb[0].mxu0 %v320
        %v769 = vpop.f32.mrb[0].mxu0
        %v770 = vadd.f32 0.0, %v769
        %v771 = vpop.f32.mrb[0].mxu0
        %v772 = vadd.f32 0.0, %v771
        %773 = vdwg.mxu0
        %774 = vmatprep.subr.mxu0 %v234
        %775 = vmatpush1.msra.mxu0 %v233
        %776 = vmatprep.subr.mxu0 %v252
        %777 = vmatpush1.msra.mxu0 %v251
        %778 = vmatprep.subr.mxu0 %v270
        %779 = vmatpush1.msra.mxu0 %v269
        %780 = vmatprep.subr.mxu0 %v288
        %781 = vmatpush1.msra.mxu0 %v287
        %782 = vmatprep.subr.mxu0 0.0
        %783 = vmatpush1.msra.mxu0 0.0
        %784 = vmatprep.subr.mxu0 0.0
        %785 = vmatpush1.msra.mxu0 0.0
        %786 = vmatprep.subr.mxu0 0.0
        %787 = vmatpush1.msra.mxu0 0.0
        %788 = vmatprep.subr.mxu0 0.0
        %789 = vmatpush1.msra.mxu0 0.0
        %790 = vmatprep.subr.mxu0 0.0
        %791 = vmatpush1.msra.mxu0 0.0
        %792 = vmatprep.subr.mxu0 0.0
        %793 = vmatpush1.msra.mxu0 0.0
        %794 = vmatprep.subr.mxu0 0.0
        %795 = vmatpush1.msra.mxu0 0.0
        %796 = vmatprep.subr.mxu0 0.0
        %797 = vmatpush1.msra.mxu0 0.0
        %798 = vmatprep.subr.mxu0 0.0
        %799 = vmatpush1.msra.mxu0 0.0
        %800 = vmatprep.subr.mxu0 0.0
        %801 = vmatpush1.msra.mxu0 0.0
        %802 = vmatprep.subr.mxu0 0.0
        %803 = vmatpush1.msra.mxu0 0.0
        %804 = vmatprep.subr.mxu0 0.0
        %805 = vmatpush1.msra.mxu0 0.0
        %806 = vmatprep.subr.mxu0 0.0
        %807 = vmatpush1.msra.mxu0 0.0
        %808 = vmatprep.subr.mxu0 0.0
        %809 = vmatpush1.msra.mxu0 0.0
        %810 = vmatprep.subr.mxu0 0.0
        %811 = vmatpush1.msra.mxu0 0.0
        %812 = vmatprep.subr.mxu0 0.0
        %813 = vmatpush1.msra.mxu0 0.0
        %814 = vmatprep.subr.mxu0 0.0
        %815 = vmatpush1.msra.mxu0 0.0
        %816 = vmatprep.subr.mxu0 0.0
        %817 = vmatpush1.msra.mxu0 0.0
        %818 = vmatprep.subr.mxu0 0.0
        %819 = vmatpush1.msra.mxu0 0.0
        %820 = vmatprep.subr.mxu0 0.0
        %821 = vmatpush1.msra.mxu0 0.0
        %822 = vmatprep.subr.mxu0 0.0
        %823 = vmatpush1.msra.mxu0 0.0
        %824 = vmatprep.subr.mxu0 0.0
        %825 = vmatpush1.msra.mxu0 0.0
        %826 = vmatprep.subr.mxu0 0.0
        %827 = vmatpush1.msra.mxu0 0.0
        %828 = vmatprep.subr.mxu0 0.0
        %829 = vmatpush1.msra.mxu0 0.0
        %830 = vmatprep.subr.mxu0 0.0
        %831 = vmatpush1.msra.mxu0 0.0
        %832 = vmatprep.subr.mxu0 0.0
        %833 = vmatpush1.msra.mxu0 0.0
        %834 = vmatprep.subr.mxu0 0.0
        %835 = vmatpush1.msra.mxu0 0.0
        %836 = vmatprep.subr.mxu0 0.0
        %837 = vmatpush1.msra.mxu0 0.0
        %838 = vmatprep.mubr.f32.mxu0 0.0
        %839 = vmatmul.mubr.f32.gmra.mrb[0].mxu0 %v299
        %v840 = vpop.f32.mrb[0].mxu0
        %v841 = vadd.f32 0.0, %v840
        %v842 = vpop.f32.mrb[0].mxu0
        %v843 = vadd.f32 0.0, %v842
        %844 = vmatprep.mubr.f32.mxu0 0.0
        %845 = vmatmul.mubr.f32.gmra.mrb[0].mxu0 %v302
        %v846 = vpop.f32.mrb[0].mxu0
        %v847 = vadd.f32 0.0, %v846
        %v848 = vpop.f32.mrb[0].mxu0
        %v849 = vadd.f32 0.0, %v848
        %850 = vmatprep.mubr.f32.mxu0 0.0
        %851 = vmatmul.mubr.f32.gmra.mrb[0].mxu0 %v305
        %v852 = vpop.f32.mrb[0].mxu0
        %v853 = vadd.f32 0.0, %v852
        %v854 = vpop.f32.mrb[0].mxu0
        %v855 = vadd.f32 0.0, %v854
        %856 = vmatprep.mubr.f32.mxu0 0.0
        %857 = vmatmul.mubr.f32.gmra.mrb[0].mxu0 %v308
        %v858 = vpop.f32.mrb[0].mxu0
        %v859 = vadd.f32 0.0, %v858
        %v860 = vpop.f32.mrb[0].mxu0
        %v861 = vadd.f32 0.0, %v860
        %862 = vmatprep.mubr.f32.mxu0 0.0
        %863 = vmatmul.mubr.f32.gmra.mrb[0].mxu0 %v311
        %v864 = vpop.f32.mrb[0].mxu0
        %v865 = vadd.f32 0.0, %v864
        %v866 = vpop.f32.mrb[0].mxu0
        %v867 = vadd.f32 0.0, %v866
        %868 = vmatprep.mubr.f32.mxu0 0.0
        %869 = vmatmul.mubr.f32.gmra.mrb[0].mxu0 %v314
        %v870 = vpop.f32.mrb[0].mxu0
        %v871 = vadd.f32 0.0, %v870
        %v872 = vpop.f32.mrb[0].mxu0
        %v873 = vadd.f32 0.0, %v872
        %874 = vmatprep.mubr.f32.mxu0 0.0
        %875 = vmatmul.mubr.f32.gmra.mrb[0].mxu0 %v317
        %v876 = vpop.f32.mrb[0].mxu0
        %v877 = vadd.f32 0.0, %v876
        %v878 = vpop.f32.mrb[0].mxu0
        %v879 = vadd.f32 0.0, %v878
        %880 = vmatprep.mubr.f32.mxu0 0.0
        %881 = vmatmul.mubr.f32.gmra.mrb[0].mxu0 %v320
        %v882 = vpop.f32.mrb[0].mxu0
        %v883 = vadd.f32 0.0, %v882
        %v884 = vpop.f32.mrb[0].mxu0
        %v885 = vadd.f32 0.0, %v884
        %886 = vdwg.mxu0
        %887 = vmatprep.subr.mxu0 %v236
        %888 = vmatpush1.msra.mxu0 %v235
        %889 = vmatprep.subr.mxu0 %v254
        %890 = vmatpush1.msra.mxu0 %v253
        %891 = vmatprep.subr.mxu0 %v272
        %892 = vmatpush1.msra.mxu0 %v271
        %893 = vmatprep.subr.mxu0 %v290
        %894 = vmatpush1.msra.mxu0 %v289
        %895 = vmatprep.subr.mxu0 0.0
        %896 = vmatpush1.msra.mxu0 0.0
        %897 = vmatprep.subr.mxu0 0.0
        %898 = vmatpush1.msra.mxu0 0.0
        %899 = vmatprep.subr.mxu0 0.0
        %900 = vmatpush1.msra.mxu0 0.0
        %901 = vmatprep.subr.mxu0 0.0
        %902 = vmatpush1.msra.mxu0 0.0
        %903 = vmatprep.subr.mxu0 0.0
        %904 = vmatpush1.msra.mxu0 0.0
        %905 = vmatprep.subr.mxu0 0.0
        %906 = vmatpush1.msra.mxu0 0.0
        %907 = vmatprep.subr.mxu0 0.0
        %908 = vmatpush1.msra.mxu0 0.0
        %909 = vmatprep.subr.mxu0 0.0
        %910 = vmatpush1.msra.mxu0 0.0
        %911 = vmatprep.subr.mxu0 0.0
        %912 = vmatpush1.msra.mxu0 0.0
        %913 = vmatprep.subr.mxu0 0.0
        %914 = vmatpush1.msra.mxu0 0.0
        %915 = vmatprep.subr.mxu0 0.0
        %916 = vmatpush1.msra.mxu0 0.0
        %917 = vmatprep.subr.mxu0 0.0
        %918 = vmatpush1.msra.mxu0 0.0
        %919 = vmatprep.subr.mxu0 0.0
        %920 = vmatpush1.msra.mxu0 0.0
        %921 = vmatprep.subr.mxu0 0.0
        %922 = vmatpush1.msra.mxu0 0.0
        %923 = vmatprep.subr.mxu0 0.0
        %924 = vmatpush1.msra.mxu0 0.0
        %925 = vmatprep.subr.mxu0 0.0
        %926 = vmatpush1.msra.mxu0 0.0
        %927 = vmatprep.subr.mxu0 0.0
        %928 = vmatpush1.msra.mxu0 0.0
        %929 = vmatprep.subr.mxu0 0.0
        %930 = vmatpush1.msra.mxu0 0.0
        %931 = vmatprep.subr.mxu0 0.0
        %932 = vmatpush1.msra.mxu0 0.0
        %933 = vmatprep.subr.mxu0 0.0
        %934 = vmatpush1.msra.mxu0 0.0
        %935 = vmatprep.subr.mxu0 0.0
        %936 = vmatpush1.msra.mxu0 0.0
        %937 = vmatprep.subr.mxu0 0.0
        %938 = vmatpush1.msra.mxu0 0.0
        %939 = vmatprep.subr.mxu0 0.0
        %940 = vmatpush1.msra.mxu0 0.0
        %941 = vmatprep.subr.mxu0 0.0
        %942 = vmatpush1.msra.mxu0 0.0
        %943 = vmatprep.subr.mxu0 0.0
        %944 = vmatpush1.msra.mxu0 0.0
        %945 = vmatprep.subr.mxu0 0.0
        %946 = vmatpush1.msra.mxu0 0.0
        %947 = vmatprep.subr.mxu0 0.0
        %948 = vmatpush1.msra.mxu0 0.0
        %949 = vmatprep.subr.mxu0 0.0
        %950 = vmatpush1.msra.mxu0 0.0
        %951 = vmatprep.mubr.f32.mxu0 0.0
        %952 = vmatmul.mubr.f32.gmra.mrb[0].mxu0 %v299
        %v953 = vpop.f32.mrb[0].mxu0
        %v954 = vadd.f32 0.0, %v953
        %v955 = vpop.f32.mrb[0].mxu0
        %v956 = vadd.f32 0.0, %v955
        %957 = vmatprep.mubr.f32.mxu0 0.0
        %958 = vmatmul.mubr.f32.gmra.mrb[0].mxu0 %v302
        %v959 = vpop.f32.mrb[0].mxu0
        %v960 = vadd.f32 0.0, %v959
        %v961 = vpop.f32.mrb[0].mxu0
        %v962 = vadd.f32 0.0, %v961
        %963 = vmatprep.mubr.f32.mxu0 0.0
        %964 = vmatmul.mubr.f32.gmra.mrb[0].mxu0 %v305
        %v965 = vpop.f32.mrb[0].mxu0
        %v966 = vadd.f32 0.0, %v965
        %v967 = vpop.f32.mrb[0].mxu0
        %v968 = vadd.f32 0.0, %v967
        %969 = vmatprep.mubr.f32.mxu0 0.0
        %970 = vmatmul.mubr.f32.gmra.mrb[0].mxu0 %v308
        %v971 = vpop.f32.mrb[0].mxu0
        %v972 = vadd.f32 0.0, %v971
        %v973 = vpop.f32.mrb[0].mxu0
        %v974 = vadd.f32 0.0, %v973
        %975 = vmatprep.mubr.f32.mxu0 0.0
        %976 = vmatmul.mubr.f32.gmra.mrb[0].mxu0 %v311
        %v977 = vpop.f32.mrb[0].mxu0
        %v978 = vadd.f32 0.0, %v977
        %v979 = vpop.f32.mrb[0].mxu0
        %v980 = vadd.f32 0.0, %v979
        %981 = vmatprep.mubr.f32.mxu0 0.0
        %982 = vmatmul.mubr.f32.gmra.mrb[0].mxu0 %v314
        %v983 = vpop.f32.mrb[0].mxu0
        %v984 = vadd.f32 0.0, %v983
        %v985 = vpop.f32.mrb[0].mxu0
        %v986 = vadd.f32 0.0, %v985
        %987 = vmatprep.mubr.f32.mxu0 0.0
        %988 = vmatmul.mubr.f32.gmra.mrb[0].mxu0 %v317
        %v989 = vpop.f32.mrb[0].mxu0
        %v990 = vadd.f32 0.0, %v989
        %v991 = vpop.f32.mrb[0].mxu0
        %v992 = vadd.f32 0.0, %v991
        %993 = vmatprep.mubr.f32.mxu0 0.0
        %994 = vmatmul.mubr.f32.gmra.mrb[0].mxu0 %v320
        %v995 = vpop.f32.mrb[0].mxu0
        %v996 = vadd.f32 0.0, %v995
        %v997 = vpop.f32.mrb[0].mxu0
        %v998 = vadd.f32 0.0, %v997
        %999 = vdwg.mxu0
        %1000 = vmatprep.subr.mxu0 %v238
        %1001 = vmatpush1.msra.mxu0 %v237
        %1002 = vmatprep.subr.mxu0 %v256
        %1003 = vmatpush1.msra.mxu0 %v255
        %1004 = vmatprep.subr.mxu0 %v274
        %1005 = vmatpush1.msra.mxu0 %v273
        %1006 = vmatprep.subr.mxu0 %v292
        %1007 = vmatpush1.msra.mxu0 %v291
        %1008 = vmatprep.subr.mxu0 0.0
        %1009 = vmatpush1.msra.mxu0 0.0
        %1010 = vmatprep.subr.mxu0 0.0
        %1011 = vmatpush1.msra.mxu0 0.0
        %1012 = vmatprep.subr.mxu0 0.0
        %1013 = vmatpush1.msra.mxu0 0.0
        %1014 = vmatprep.subr.mxu0 0.0
        %1015 = vmatpush1.msra.mxu0 0.0
        %1016 = vmatprep.subr.mxu0 0.0
        %1017 = vmatpush1.msra.mxu0 0.0
        %1018 = vmatprep.subr.mxu0 0.0
        %1019 = vmatpush1.msra.mxu0 0.0
        %1020 = vmatprep.subr.mxu0 0.0
        %1021 = vmatpush1.msra.mxu0 0.0
        %1022 = vmatprep.subr.mxu0 0.0
        %1023 = vmatpush1.msra.mxu0 0.0
        %1024 = vmatprep.subr.mxu0 0.0
        %1025 = vmatpush1.msra.mxu0 0.0
        %1026 = vmatprep.subr.mxu0 0.0
        %1027 = vmatpush1.msra.mxu0 0.0
        %1028 = vmatprep.subr.mxu0 0.0
        %1029 = vmatpush1.msra.mxu0 0.0
        %1030 = vmatprep.subr.mxu0 0.0
        %1031 = vmatpush1.msra.mxu0 0.0
        %1032 = vmatprep.subr.mxu0 0.0
        %1033 = vmatpush1.msra.mxu0 0.0
        %1034 = vmatprep.subr.mxu0 0.0
        %1035 = vmatpush1.msra.mxu0 0.0
        %1036 = vmatprep.subr.mxu0 0.0
        %1037 = vmatpush1.msra.mxu0 0.0
        %1038 = vmatprep.subr.mxu0 0.0
        %1039 = vmatpush1.msra.mxu0 0.0
        %1040 = vmatprep.subr.mxu0 0.0
        %1041 = vmatpush1.msra.mxu0 0.0
        %1042 = vmatprep.subr.mxu0 0.0
        %1043 = vmatpush1.msra.mxu0 0.0
        %1044 = vmatprep.subr.mxu0 0.0
        %1045 = vmatpush1.msra.mxu0 0.0
        %1046 = vmatprep.subr.mxu0 0.0
        %1047 = vmatpush1.msra.mxu0 0.0
        %1048 = vmatprep.subr.mxu0 0.0
        %1049 = vmatpush1.msra.mxu0 0.0
        %1050 = vmatprep.subr.mxu0 0.0
        %1051 = vmatpush1.msra.mxu0 0.0
        %1052 = vmatprep.subr.mxu0 0.0
        %1053 = vmatpush1.msra.mxu0 0.0
        %1054 = vmatprep.subr.mxu0 0.0
        %1055 = vmatpush1.msra.mxu0 0.0
        %1056 = vmatprep.subr.mxu0 0.0
        %1057 = vmatpush1.msra.mxu0 0.0
        %1058 = vmatprep.subr.mxu0 0.0
        %1059 = vmatpush1.msra.mxu0 0.0
        %1060 = vmatprep.subr.mxu0 0.0
        %1061 = vmatpush1.msra.mxu0 0.0
        %1062 = vmatprep.subr.mxu0 0.0
        %1063 = vmatpush1.msra.mxu0 0.0
        %1064 = vmatprep.mubr.f32.mxu0 0.0
        %1065 = vmatmul.mubr.f32.gmra.mrb[0].mxu0 %v299
        %v1066 = vpop.f32.mrb[0].mxu0
        %v1067 = vadd.f32 0.0, %v1066
        %v1068 = vpop.f32.mrb[0].mxu0
        %v1069 = vadd.f32 0.0, %v1068
        %1070 = vmatprep.mubr.f32.mxu0 0.0
        %1071 = vmatmul.mubr.f32.gmra.mrb[0].mxu0 %v302
        %v1072 = vpop.f32.mrb[0].mxu0
        %v1073 = vadd.f32 0.0, %v1072
        %v1074 = vpop.f32.mrb[0].mxu0
        %v1075 = vadd.f32 0.0, %v1074
        %1076 = vmatprep.mubr.f32.mxu0 0.0
        %1077 = vmatmul.mubr.f32.gmra.mrb[0].mxu0 %v305
        %v1078 = vpop.f32.mrb[0].mxu0
        %v1079 = vadd.f32 0.0, %v1078
        %v1080 = vpop.f32.mrb[0].mxu0
        %v1081 = vadd.f32 0.0, %v1080
        %1082 = vmatprep.mubr.f32.mxu0 0.0
        %1083 = vmatmul.mubr.f32.gmra.mrb[0].mxu0 %v308
        %v1084 = vpop.f32.mrb[0].mxu0
        %v1085 = vadd.f32 0.0, %v1084
        %v1086 = vpop.f32.mrb[0].mxu0
        %v1087 = vadd.f32 0.0, %v1086
        %1088 = vmatprep.mubr.f32.mxu0 0.0
        %1089 = vmatmul.mubr.f32.gmra.mrb[0].mxu0 %v311
        %v1090 = vpop.f32.mrb[0].mxu0
        %v1091 = vadd.f32 0.0, %v1090
        %v1092 = vpop.f32.mrb[0].mxu0
        %v1093 = vadd.f32 0.0, %v1092
        %1094 = vmatprep.mubr.f32.mxu0 0.0
        %1095 = vmatmul.mubr.f32.gmra.mrb[0].mxu0 %v314
        %v1096 = vpop.f32.mrb[0].mxu0
        %v1097 = vadd.f32 0.0, %v1096
        %v1098 = vpop.f32.mrb[0].mxu0
        %v1099 = vadd.f32 0.0, %v1098
        %1100 = vmatprep.mubr.f32.mxu0 0.0
        %1101 = vmatmul.mubr.f32.gmra.mrb[0].mxu0 %v317
        %v1102 = vpop.f32.mrb[0].mxu0
        %v1103 = vadd.f32 0.0, %v1102
        %v1104 = vpop.f32.mrb[0].mxu0
        %v1105 = vadd.f32 0.0, %v1104
        %1106 = vmatprep.mubr.f32.mxu0 0.0
        %1107 = vmatmul.mubr.f32.gmra.mrb[0].mxu0 %v320
        %v1108 = vpop.f32.mrb[0].mxu0
        %v1109 = vadd.f32 0.0, %v1108
        %v1110 = vpop.f32.mrb[0].mxu0
        %v1111 = vadd.f32 0.0, %v1110
        %1112 = vdwg.mxu0
        %1113 = vmatprep.subr.mxu0 %v240
        %1114 = vmatpush1.msra.mxu0 %v239
        %1115 = vmatprep.subr.mxu0 %v258
        %1116 = vmatpush1.msra.mxu0 %v257
        %1117 = vmatprep.subr.mxu0 %v276
        %1118 = vmatpush1.msra.mxu0 %v275
        %1119 = vmatprep.subr.mxu0 %v294
        %1120 = vmatpush1.msra.mxu0 %v293
        %1121 = vmatprep.subr.mxu0 0.0
        %1122 = vmatpush1.msra.mxu0 0.0
        %1123 = vmatprep.subr.mxu0 0.0
        %1124 = vmatpush1.msra.mxu0 0.0
        %1125 = vmatprep.subr.mxu0 0.0
        %1126 = vmatpush1.msra.mxu0 0.0
        %1127 = vmatprep.subr.mxu0 0.0
        %1128 = vmatpush1.msra.mxu0 0.0
        %1129 = vmatprep.subr.mxu0 0.0
        %1130 = vmatpush1.msra.mxu0 0.0
        %1131 = vmatprep.subr.mxu0 0.0
        %1132 = vmatpush1.msra.mxu0 0.0
        %1133 = vmatprep.subr.mxu0 0.0
        %1134 = vmatpush1.msra.mxu0 0.0
        %1135 = vmatprep.subr.mxu0 0.0
        %1136 = vmatpush1.msra.mxu0 0.0
        %1137 = vmatprep.subr.mxu0 0.0
        %1138 = vmatpush1.msra.mxu0 0.0
        %1139 = vmatprep.subr.mxu0 0.0
        %1140 = vmatpush1.msra.mxu0 0.0
        %1141 = vmatprep.subr.mxu0 0.0
        %1142 = vmatpush1.msra.mxu0 0.0
        %1143 = vmatprep.subr.mxu0 0.0
        %1144 = vmatpush1.msra.mxu0 0.0
        %1145 = vmatprep.subr.mxu0 0.0
        %1146 = vmatpush1.msra.mxu0 0.0
        %1147 = vmatprep.subr.mxu0 0.0
        %1148 = vmatpush1.msra.mxu0 0.0
        %1149 = vmatprep.subr.mxu0 0.0
        %1150 = vmatpush1.msra.mxu0 0.0
        %1151 = vmatprep.subr.mxu0 0.0
        %1152 = vmatpush1.msra.mxu0 0.0
        %1153 = vmatprep.subr.mxu0 0.0
        %1154 = vmatpush1.msra.mxu0 0.0
        %1155 = vmatprep.subr.mxu0 0.0
        %1156 = vmatpush1.msra.mxu0 0.0
        %1157 = vmatprep.subr.mxu0 0.0
        %1158 = vmatpush1.msra.mxu0 0.0
        %1159 = vmatprep.subr.mxu0 0.0
        %1160 = vmatpush1.msra.mxu0 0.0
        %1161 = vmatprep.subr.mxu0 0.0
        %1162 = vmatpush1.msra.mxu0 0.0
        %1163 = vmatprep.subr.mxu0 0.0
        %1164 = vmatpush1.msra.mxu0 0.0
        %1165 = vmatprep.subr.mxu0 0.0
        %1166 = vmatpush1.msra.mxu0 0.0
        %1167 = vmatprep.subr.mxu0 0.0
        %1168 = vmatpush1.msra.mxu0 0.0
        %1169 = vmatprep.subr.mxu0 0.0
        %1170 = vmatpush1.msra.mxu0 0.0
        %1171 = vmatprep.subr.mxu0 0.0
        %1172 = vmatpush1.msra.mxu0 0.0
        %1173 = vmatprep.subr.mxu0 0.0
        %1174 = vmatpush1.msra.mxu0 0.0
        %1175 = vmatprep.subr.mxu0 0.0
        %1176 = vmatpush1.msra.mxu0 0.0
        %1177 = vmatprep.mubr.f32.mxu0 0.0
        %1178 = vmatmul.mubr.f32.gmra.mrb[0].mxu0 %v299
        %v1179 = vpop.f32.mrb[0].mxu0
        %v1180 = vadd.f32 0.0, %v1179
        %v1181 = vpop.f32.mrb[0].mxu0
        %v1182 = vadd.f32 0.0, %v1181
        %1183 = vmatprep.mubr.f32.mxu0 0.0
        %1184 = vmatmul.mubr.f32.gmra.mrb[0].mxu0 %v302
        %v1185 = vpop.f32.mrb[0].mxu0
        %v1186 = vadd.f32 0.0, %v1185
        %v1187 = vpop.f32.mrb[0].mxu0
        %v1188 = vadd.f32 0.0, %v1187
        %1189 = vmatprep.mubr.f32.mxu0 0.0
        %1190 = vmatmul.mubr.f32.gmra.mrb[0].mxu0 %v305
        %v1191 = vpop.f32.mrb[0].mxu0
        %v1192 = vadd.f32 0.0, %v1191
        %v1193 = vpop.f32.mrb[0].mxu0
        %v1194 = vadd.f32 0.0, %v1193
        %1195 = vmatprep.mubr.f32.mxu0 0.0
        %1196 = vmatmul.mubr.f32.gmra.mrb[0].mxu0 %v308
        %v1197 = vpop.f32.mrb[0].mxu0
        %v1198 = vadd.f32 0.0, %v1197
        %v1199 = vpop.f32.mrb[0].mxu0
        %v1200 = vadd.f32 0.0, %v1199
        %1201 = vmatprep.mubr.f32.mxu0 0.0
        %1202 = vmatmul.mubr.f32.gmra.mrb[0].mxu0 %v311
        %v1203 = vpop.f32.mrb[0].mxu0
        %v1204 = vadd.f32 0.0, %v1203
        %v1205 = vpop.f32.mrb[0].mxu0
        %v1206 = vadd.f32 0.0, %v1205
        %1207 = vmatprep.mubr.f32.mxu0 0.0
        %1208 = vmatmul.mubr.f32.gmra.mrb[0].mxu0 %v314
        %v1209 = vpop.f32.mrb[0].mxu0
        %v1210 = vadd.f32 0.0, %v1209
        %v1211 = vpop.f32.mrb[0].mxu0
        %v1212 = vadd.f32 0.0, %v1211
        %1213 = vmatprep.mubr.f32.mxu0 0.0
        %1214 = vmatmul.mubr.f32.gmra.mrb[0].mxu0 %v317
        %v1215 = vpop.f32.mrb[0].mxu0
        %v1216 = vadd.f32 0.0, %v1215
        %v1217 = vpop.f32.mrb[0].mxu0
        %v1218 = vadd.f32 0.0, %v1217
        %1219 = vmatprep.mubr.f32.mxu0 0.0
        %1220 = vmatmul.mubr.f32.gmra.mrb[0].mxu0 %v320
        %v1221 = vpop.f32.mrb[0].mxu0
        %v1222 = vadd.f32 0.0, %v1221
        %v1223 = vpop.f32.mrb[0].mxu0
        %v1224 = vadd.f32 0.0, %v1223
        %1225 = vdwg.mxu0
        %1226 = vmatprep.subr.mxu0 %v242
        %1227 = vmatpush1.msra.mxu0 %v241
        %1228 = vmatprep.subr.mxu0 %v260
        %1229 = vmatpush1.msra.mxu0 %v259
        %1230 = vmatprep.subr.mxu0 %v278
        %1231 = vmatpush1.msra.mxu0 %v277
        %1232 = vmatprep.subr.mxu0 %v296
        %1233 = vmatpush1.msra.mxu0 %v295
        %1234 = vmatprep.subr.mxu0 0.0
        %1235 = vmatpush1.msra.mxu0 0.0
        %1236 = vmatprep.subr.mxu0 0.0
        %1237 = vmatpush1.msra.mxu0 0.0
        %1238 = vmatprep.subr.mxu0 0.0
        %1239 = vmatpush1.msra.mxu0 0.0
        %1240 = vmatprep.subr.mxu0 0.0
        %1241 = vmatpush1.msra.mxu0 0.0
        %1242 = vmatprep.subr.mxu0 0.0
        %1243 = vmatpush1.msra.mxu0 0.0
        %1244 = vmatprep.subr.mxu0 0.0
        %1245 = vmatpush1.msra.mxu0 0.0
        %1246 = vmatprep.subr.mxu0 0.0
        %1247 = vmatpush1.msra.mxu0 0.0
        %1248 = vmatprep.subr.mxu0 0.0
        %1249 = vmatpush1.msra.mxu0 0.0
        %1250 = vmatprep.subr.mxu0 0.0
        %1251 = vmatpush1.msra.mxu0 0.0
        %1252 = vmatprep.subr.mxu0 0.0
        %1253 = vmatpush1.msra.mxu0 0.0
        %1254 = vmatprep.subr.mxu0 0.0
        %1255 = vmatpush1.msra.mxu0 0.0
        %1256 = vmatprep.subr.mxu0 0.0
        %1257 = vmatpush1.msra.mxu0 0.0
        %1258 = vmatprep.subr.mxu0 0.0
        %1259 = vmatpush1.msra.mxu0 0.0
        %1260 = vmatprep.subr.mxu0 0.0
        %1261 = vmatpush1.msra.mxu0 0.0
        %1262 = vmatprep.subr.mxu0 0.0
        %1263 = vmatpush1.msra.mxu0 0.0
        %1264 = vmatprep.subr.mxu0 0.0
        %1265 = vmatpush1.msra.mxu0 0.0
        %1266 = vmatprep.subr.mxu0 0.0
        %1267 = vmatpush1.msra.mxu0 0.0
        %1268 = vmatprep.subr.mxu0 0.0
        %1269 = vmatpush1.msra.mxu0 0.0
        %1270 = vmatprep.subr.mxu0 0.0
        %1271 = vmatpush1.msra.mxu0 0.0
        %1272 = vmatprep.subr.mxu0 0.0
        %1273 = vmatpush1.msra.mxu0 0.0
        %1274 = vmatprep.subr.mxu0 0.0
        %1275 = vmatpush1.msra.mxu0 0.0
        %1276 = vmatprep.subr.mxu0 0.0
        %1277 = vmatpush1.msra.mxu0 0.0
        %1278 = vmatprep.subr.mxu0 0.0
        %1279 = vmatpush1.msra.mxu0 0.0
        %1280 = vmatprep.subr.mxu0 0.0
        %1281 = vmatpush1.msra.mxu0 0.0
        %1282 = vmatprep.subr.mxu0 0.0
        %1283 = vmatpush1.msra.mxu0 0.0
        %1284 = vmatprep.subr.mxu0 0.0
        %1285 = vmatpush1.msra.mxu0 0.0
        %1286 = vmatprep.subr.mxu0 0.0
        %1287 = vmatpush1.msra.mxu0 0.0
        %1288 = vmatprep.subr.mxu0 0.0
        %1289 = vmatpush1.msra.mxu0 0.0
        %1290 = vmatprep.mubr.f32.mxu0 0.0
        %1291 = vmatmul.mubr.f32.gmra.mrb[0].mxu0 %v299
        %v1292 = vpop.f32.mrb[0].mxu0
        %v1293 = vadd.f32 0.0, %v1292
        %v1294 = vpop.f32.mrb[0].mxu0
        %v1295 = vadd.f32 0.0, %v1294
        %1296 = vmatprep.mubr.f32.mxu0 0.0
        %1297 = vmatmul.mubr.f32.gmra.mrb[0].mxu0 %v302
        %v1298 = vpop.f32.mrb[0].mxu0
        %v1299 = vadd.f32 0.0, %v1298
        %v1300 = vpop.f32.mrb[0].mxu0
        %v1301 = vadd.f32 0.0, %v1300
        %1302 = vmatprep.mubr.f32.mxu0 0.0
        %1303 = vmatmul.mubr.f32.gmra.mrb[0].mxu0 %v305
        %v1304 = vpop.f32.mrb[0].mxu0
        %v1305 = vadd.f32 0.0, %v1304
        %v1306 = vpop.f32.mrb[0].mxu0
        %v1307 = vadd.f32 0.0, %v1306
        %1308 = vmatprep.mubr.f32.mxu0 0.0
        %1309 = vmatmul.mubr.f32.gmra.mrb[0].mxu0 %v308
        %v1310 = vpop.f32.mrb[0].mxu0
        %v1311 = vadd.f32 0.0, %v1310
        %v1312 = vpop.f32.mrb[0].mxu0
        %v1313 = vadd.f32 0.0, %v1312
        %1314 = vmatprep.mubr.f32.mxu0 0.0
        %1315 = vmatmul.mubr.f32.gmra.mrb[0].mxu0 %v311
        %v1316 = vpop.f32.mrb[0].mxu0
        %v1317 = vadd.f32 0.0, %v1316
        %v1318 = vpop.f32.mrb[0].mxu0
        %v1319 = vadd.f32 0.0, %v1318
        %1320 = vmatprep.mubr.f32.mxu0 0.0
        %1321 = vmatmul.mubr.f32.gmra.mrb[0].mxu0 %v314
        %v1322 = vpop.f32.mrb[0].mxu0
        %v1323 = vadd.f32 0.0, %v1322
        %v1324 = vpop.f32.mrb[0].mxu0
        %v1325 = vadd.f32 0.0, %v1324
        %1326 = vmatprep.mubr.f32.mxu0 0.0
        %1327 = vmatmul.mubr.f32.gmra.mrb[0].mxu0 %v317
        %v1328 = vpop.f32.mrb[0].mxu0
        %v1329 = vadd.f32 0.0, %v1328
        %v1330 = vpop.f32.mrb[0].mxu0
        %v1331 = vadd.f32 0.0, %v1330
        %1332 = vmatprep.mubr.f32.mxu0 0.0
        %1333 = vmatmul.mubr.f32.gmra.mrb[0].mxu0 %v320
        %v1334 = vpop.f32.mrb[0].mxu0
        %v1335 = vadd.f32 0.0, %v1334
        %v1336 = vpop.f32.mrb[0].mxu0
        %v1337 = vadd.f32 0.0, %v1336
        %1338 = vdwg.mxu0
        %v1339 = vrot.slane %v389, 4
        %v1340 = vmax.f32 %v389, %v1339
        %v1341 = vrot.slane %v1340, 2
        %v1342 = vmax.f32 %v1340, %v1341
        %v1343 = vrot.slane %v1342, 1
        %v1344 = vmax.f32 %v1342, %v1343
        %v1345 = vrot.slane %v391, 4
        %v1346 = vmax.f32 %v391, %v1345
        %v1347 = vrot.slane %v1346, 2
        %v1348 = vmax.f32 %v1346, %v1347
        %v1349 = vrot.slane %v1348, 1
        %v1350 = vmax.f32 %v1348, %v1349
        %v1351 = vrot.slane %v395, 4
        %v1352 = vmax.f32 %v395, %v1351
        %v1353 = vrot.slane %v1352, 2
        %v1354 = vmax.f32 %v1352, %v1353
        %v1355 = vrot.slane %v1354, 1
        %v1356 = vmax.f32 %v1354, %v1355
        %v1357 = vrot.slane %v397, 4
        %v1358 = vmax.f32 %v397, %v1357
        %v1359 = vrot.slane %v1358, 2
        %v1360 = vmax.f32 %v1358, %v1359
        %v1361 = vrot.slane %v1360, 1
        %v1362 = vmax.f32 %v1360, %v1361
        %v1363 = vrot.slane %v401, 4
        %v1364 = vmax.f32 %v401, %v1363
        %v1365 = vrot.slane %v1364, 2
        %v1366 = vmax.f32 %v1364, %v1365
        %v1367 = vrot.slane %v1366, 1
        %v1368 = vmax.f32 %v1366, %v1367
        %v1369 = vrot.slane %v403, 4
        %v1370 = vmax.f32 %v403, %v1369
        %v1371 = vrot.slane %v1370, 2
        %v1372 = vmax.f32 %v1370, %v1371
        %v1373 = vrot.slane %v1372, 1
        %v1374 = vmax.f32 %v1372, %v1373
        %v1375 = vrot.slane %v407, 4
        %v1376 = vmax.f32 %v407, %v1375
        %v1377 = vrot.slane %v1376, 2
        %v1378 = vmax.f32 %v1376, %v1377
        %v1379 = vrot.slane %v1378, 1
        %v1380 = vmax.f32 %v1378, %v1379
        %v1381 = vrot.slane %v409, 4
        %v1382 = vmax.f32 %v409, %v1381
        %v1383 = vrot.slane %v1382, 2
        %v1384 = vmax.f32 %v1382, %v1383
        %v1385 = vrot.slane %v1384, 1
        %v1386 = vmax.f32 %v1384, %v1385
        %v1387 = vrot.slane %v413, 4
        %v1388 = vmax.f32 %v413, %v1387
        %v1389 = vrot.slane %v1388, 2
        %v1390 = vmax.f32 %v1388, %v1389
        %v1391 = vrot.slane %v1390, 1
        %v1392 = vmax.f32 %v1390, %v1391
        %v1393 = vrot.slane %v415, 4
        %v1394 = vmax.f32 %v415, %v1393
        %v1395 = vrot.slane %v1394, 2
        %v1396 = vmax.f32 %v1394, %v1395
        %v1397 = vrot.slane %v1396, 1
        %v1398 = vmax.f32 %v1396, %v1397
        %v1399 = vrot.slane %v419, 4
        %v1400 = vmax.f32 %v419, %v1399
        %v1401 = vrot.slane %v1400, 2
        %v1402 = vmax.f32 %v1400, %v1401
        %v1403 = vrot.slane %v1402, 1
        %v1404 = vmax.f32 %v1402, %v1403
        %v1405 = vrot.slane %v421, 4
        %v1406 = vmax.f32 %v421, %v1405
        %v1407 = vrot.slane %v1406, 2
        %v1408 = vmax.f32 %v1406, %v1407
        %v1409 = vrot.slane %v1408, 1
        %v1410 = vmax.f32 %v1408, %v1409
        %v1411 = vrot.slane %v425, 4
        %v1412 = vmax.f32 %v425, %v1411
        %v1413 = vrot.slane %v1412, 2
        %v1414 = vmax.f32 %v1412, %v1413
        %v1415 = vrot.slane %v1414, 1
        %v1416 = vmax.f32 %v1414, %v1415
        %v1417 = vrot.slane %v427, 4
        %v1418 = vmax.f32 %v427, %v1417
        %v1419 = vrot.slane %v1418, 2
        %v1420 = vmax.f32 %v1418, %v1419
        %v1421 = vrot.slane %v1420, 1
        %v1422 = vmax.f32 %v1420, %v1421
        %v1423 = vrot.slane %v431, 4
        %v1424 = vmax.f32 %v431, %v1423
        %v1425 = vrot.slane %v1424, 2
        %v1426 = vmax.f32 %v1424, %v1425
        %v1427 = vrot.slane %v1426, 1
        %v1428 = vmax.f32 %v1426, %v1427
        %v1429 = vrot.slane %v433, 4
        %v1430 = vmax.f32 %v433, %v1429
        %v1431 = vrot.slane %v1430, 2
        %v1432 = vmax.f32 %v1430, %v1431
        %v1433 = vrot.slane %v1432, 1
        %v1434 = vmax.f32 %v1432, %v1433
        %v1451 = vrot.slane %v615, 1
        %v1452 = vrot.slane %v617, 1
        %v1453 = vrot.slane %v621, 1
        %v1454 = vrot.slane %v623, 1
        %v1455 = vrot.slane %v627, 1
        %v1456 = vrot.slane %v629, 1
        %v1457 = vrot.slane %v633, 1
        %v1458 = vrot.slane %v635, 1
        %v1459 = vrot.slane %v639, 1
        %v1460 = vrot.slane %v641, 1
        %v1461 = vrot.slane %v645, 1
        %v1462 = vrot.slane %v647, 1
        %v1463 = vrot.slane %v651, 1
        %v1464 = vrot.slane %v653, 1
        %v1465 = vrot.slane %v657, 1
        %v1466 = vrot.slane %v659, 1
        %v1483 = vadd.f32 %v502, %v1451
        %v1484 = vadd.f32 %v504, %v1452
        %v1485 = vadd.f32 %v508, %v1453
        %v1486 = vadd.f32 %v510, %v1454
        %v1487 = vadd.f32 %v514, %v1455
        %v1488 = vadd.f32 %v516, %v1456
        %v1489 = vadd.f32 %v520, %v1457
        %v1490 = vadd.f32 %v522, %v1458
        %v1491 = vadd.f32 %v526, %v1459
        %v1492 = vadd.f32 %v528, %v1460
        %v1493 = vadd.f32 %v532, %v1461
        %v1494 = vadd.f32 %v534, %v1462
        %v1495 = vadd.f32 %v538, %v1463
        %v1496 = vadd.f32 %v540, %v1464
        %v1497 = vadd.f32 %v544, %v1465
        %v1498 = vadd.f32 %v546, %v1466
        %vm1499 = vcmask 1046528
        %v1500 = vsel %vm1499, %v1483, -inf
        %v1501 = vrot.slane %v1500, 4
        %v1502 = vmax.f32 %v1500, %v1501
        %v1503 = vrot.slane %v1502, 2
        %v1504 = vmax.f32 %v1502, %v1503
        %v1505 = vrot.slane %v1504, 1
        %v1506 = vmax.f32 %v1504, %v1505
        %v1507 = vsel %vm1499, %v1484, -inf
        %v1508 = vrot.slane %v1507, 4
        %v1509 = vmax.f32 %v1507, %v1508
        %v1510 = vrot.slane %v1509, 2
        %v1511 = vmax.f32 %v1509, %v1510
        %v1512 = vrot.slane %v1511, 1
        %v1513 = vmax.f32 %v1511, %v1512
        %v1514 = vsel %vm1499, %v1485, -inf
        %v1515 = vrot.slane %v1514, 4
        %v1516 = vmax.f32 %v1514, %v1515
        %v1517 = vrot.slane %v1516, 2
        %v1518 = vmax.f32 %v1516, %v1517
        %v1519 = vrot.slane %v1518, 1
        %v1520 = vmax.f32 %v1518, %v1519
        %v1521 = vsel %vm1499, %v1486, -inf
        %v1522 = vrot.slane %v1521, 4
        %v1523 = vmax.f32 %v1521, %v1522
        %v1524 = vrot.slane %v1523, 2
        %v1525 = vmax.f32 %v1523, %v1524
        %v1526 = vrot.slane %v1525, 1
        %v1527 = vmax.f32 %v1525, %v1526
        %v1528 = vsel %vm1499, %v1487, -inf
        %v1529 = vrot.slane %v1528, 4
        %v1530 = vmax.f32 %v1528, %v1529
        %v1531 = vrot.slane %v1530, 2
        %v1532 = vmax.f32 %v1530, %v1531
        %v1533 = vrot.slane %v1532, 1
        %v1534 = vmax.f32 %v1532, %v1533
        %v1535 = vsel %vm1499, %v1488, -inf
        %v1536 = vrot.slane %v1535, 4
        %v1537 = vmax.f32 %v1535, %v1536
        %v1538 = vrot.slane %v1537, 2
        %v1539 = vmax.f32 %v1537, %v1538
        %v1540 = vrot.slane %v1539, 1
        %v1541 = vmax.f32 %v1539, %v1540
        %v1542 = vsel %vm1499, %v1489, -inf
        %v1543 = vrot.slane %v1542, 4
        %v1544 = vmax.f32 %v1542, %v1543
        %v1545 = vrot.slane %v1544, 2
        %v1546 = vmax.f32 %v1544, %v1545
        %v1547 = vrot.slane %v1546, 1
        %v1548 = vmax.f32 %v1546, %v1547
        %v1549 = vsel %vm1499, %v1490, -inf
        %v1550 = vrot.slane %v1549, 4
        %v1551 = vmax.f32 %v1549, %v1550
        %v1552 = vrot.slane %v1551, 2
        %v1553 = vmax.f32 %v1551, %v1552
        %v1554 = vrot.slane %v1553, 1
        %v1555 = vmax.f32 %v1553, %v1554
        %v1556 = vsel %vm1499, %v1491, -inf
        %v1557 = vrot.slane %v1556, 4
        %v1558 = vmax.f32 %v1556, %v1557
        %v1559 = vrot.slane %v1558, 2
        %v1560 = vmax.f32 %v1558, %v1559
        %v1561 = vrot.slane %v1560, 1
        %v1562 = vmax.f32 %v1560, %v1561
        %v1563 = vsel %vm1499, %v1492, -inf
        %v1564 = vrot.slane %v1563, 4
        %v1565 = vmax.f32 %v1563, %v1564
        %v1566 = vrot.slane %v1565, 2
        %v1567 = vmax.f32 %v1565, %v1566
        %v1568 = vrot.slane %v1567, 1
        %v1569 = vmax.f32 %v1567, %v1568
        %v1570 = vsel %vm1499, %v1493, -inf
        %v1571 = vrot.slane %v1570, 4
        %v1572 = vmax.f32 %v1570, %v1571
        %v1573 = vrot.slane %v1572, 2
        %v1574 = vmax.f32 %v1572, %v1573
        %v1575 = vrot.slane %v1574, 1
        %v1576 = vmax.f32 %v1574, %v1575
        %v1577 = vsel %vm1499, %v1494, -inf
        %v1578 = vrot.slane %v1577, 4
        %v1579 = vmax.f32 %v1577, %v1578
        %v1580 = vrot.slane %v1579, 2
        %v1581 = vmax.f32 %v1579, %v1580
        %v1582 = vrot.slane %v1581, 1
        %v1583 = vmax.f32 %v1581, %v1582
        %v1584 = vsel %vm1499, %v1495, -inf
        %v1585 = vrot.slane %v1584, 4
        %v1586 = vmax.f32 %v1584, %v1585
        %v1587 = vrot.slane %v1586, 2
        %v1588 = vmax.f32 %v1586, %v1587
        %v1589 = vrot.slane %v1588, 1
        %v1590 = vmax.f32 %v1588, %v1589
        %v1591 = vsel %vm1499, %v1496, -inf
        %v1592 = vrot.slane %v1591, 4
        %v1593 = vmax.f32 %v1591, %v1592
        %v1594 = vrot.slane %v1593, 2
        %v1595 = vmax.f32 %v1593, %v1594
        %v1596 = vrot.slane %v1595, 1
        %v1597 = vmax.f32 %v1595, %v1596
        %v1598 = vsel %vm1499, %v1497, -inf
        %v1599 = vrot.slane %v1598, 4
        %v1600 = vmax.f32 %v1598, %v1599
        %v1601 = vrot.slane %v1600, 2
        %v1602 = vmax.f32 %v1600, %v1601
        %v1603 = vrot.slane %v1602, 1
        %v1604 = vmax.f32 %v1602, %v1603
        %v1605 = vsel %vm1499, %v1498, -inf
        %v1606 = vrot.slane %v1605, 4
        %v1607 = vmax.f32 %v1605, %v1606
        %v1608 = vrot.slane %v1607, 2
        %v1609 = vmax.f32 %v1607, %v1608
        %v1610 = vrot.slane %v1609, 1
        %v1611 = vmax.f32 %v1609, %v1610
        %v1644 = vrot.slane %v954, 1
        %v1645 = vrot.slane %v956, 1
        %v1646 = vrot.slane %v1067, 1
        %v1647 = vrot.slane %v1069, 1
        %v1648 = vrot.slane %v960, 1
        %v1649 = vrot.slane %v962, 1
        %v1650 = vrot.slane %v1073, 1
        %v1651 = vrot.slane %v1075, 1
        %v1652 = vrot.slane %v966, 1
        %v1653 = vrot.slane %v968, 1
        %v1654 = vrot.slane %v1079, 1
        %v1655 = vrot.slane %v1081, 1
        %v1656 = vrot.slane %v972, 1
        %v1657 = vrot.slane %v974, 1
        %v1658 = vrot.slane %v1085, 1
        %v1659 = vrot.slane %v1087, 1
        %v1660 = vrot.slane %v978, 1
        %v1661 = vrot.slane %v980, 1
        %v1662 = vrot.slane %v1091, 1
        %v1663 = vrot.slane %v1093, 1
        %v1664 = vrot.slane %v984, 1
        %v1665 = vrot.slane %v986, 1
        %v1666 = vrot.slane %v1097, 1
        %v1667 = vrot.slane %v1099, 1
        %v1668 = vrot.slane %v990, 1
        %v1669 = vrot.slane %v992, 1
        %v1670 = vrot.slane %v1103, 1
        %v1671 = vrot.slane %v1105, 1
        %v1672 = vrot.slane %v996, 1
        %v1673 = vrot.slane %v998, 1
        %v1674 = vrot.slane %v1109, 1
        %v1675 = vrot.slane %v1111, 1
        %v1708 = vadd.f32 %v728, %v1644
        %v1709 = vadd.f32 %v730, %v1645
        %v1710 = vadd.f32 %v841, %v1646
        %v1711 = vadd.f32 %v843, %v1647
        %v1712 = vadd.f32 %v734, %v1648
        %v1713 = vadd.f32 %v736, %v1649
        %v1714 = vadd.f32 %v847, %v1650
        %v1715 = vadd.f32 %v849, %v1651
        %v1716 = vadd.f32 %v740, %v1652
        %v1717 = vadd.f32 %v742, %v1653
        %v1718 = vadd.f32 %v853, %v1654
        %v1719 = vadd.f32 %v855, %v1655
        %v1720 = vadd.f32 %v746, %v1656
        %v1721 = vadd.f32 %v748, %v1657
        %v1722 = vadd.f32 %v859, %v1658
        %v1723 = vadd.f32 %v861, %v1659
        %v1724 = vadd.f32 %v752, %v1660
        %v1725 = vadd.f32 %v754, %v1661
        %v1726 = vadd.f32 %v865, %v1662
        %v1727 = vadd.f32 %v867, %v1663
        %v1728 = vadd.f32 %v758, %v1664
        %v1729 = vadd.f32 %v760, %v1665
        %v1730 = vadd.f32 %v871, %v1666
        %v1731 = vadd.f32 %v873, %v1667
        %v1732 = vadd.f32 %v764, %v1668
        %v1733 = vadd.f32 %v766, %v1669
        %v1734 = vadd.f32 %v877, %v1670
        %v1735 = vadd.f32 %v879, %v1671
        %v1736 = vadd.f32 %v770, %v1672
        %v1737 = vadd.f32 %v772, %v1673
        %v1738 = vadd.f32 %v883, %v1674
        %v1739 = vadd.f32 %v885, %v1675
        %v1772 = vrot.slane %v1180, 2
        %v1773 = vrot.slane %v1182, 2
        %v1774 = vrot.slane %v1293, 2
        %v1775 = vrot.slane %v1295, 2
        %v1776 = vrot.slane %v1186, 2
        %v1777 = vrot.slane %v1188, 2
        %v1778 = vrot.slane %v1299, 2
        %v1779 = vrot.slane %v1301, 2
        %v1780 = vrot.slane %v1192, 2
        %v1781 = vrot.slane %v1194, 2
        %v1782 = vrot.slane %v1305, 2
        %v1783 = vrot.slane %v1307, 2
        %v1784 = vrot.slane %v1198, 2
        %v1785 = vrot.slane %v1200, 2
        %v1786 = vrot.slane %v1311, 2
        %v1787 = vrot.slane %v1313, 2
        %v1788 = vrot.slane %v1204, 2
        %v1789 = vrot.slane %v1206, 2
        %v1790 = vrot.slane %v1317, 2
        %v1791 = vrot.slane %v1319, 2
        %v1792 = vrot.slane %v1210, 2
        %v1793 = vrot.slane %v1212, 2
        %v1794 = vrot.slane %v1323, 2
        %v1795 = vrot.slane %v1325, 2
        %v1796 = vrot.slane %v1216, 2
        %v1797 = vrot.slane %v1218, 2
        %v1798 = vrot.slane %v1329, 2
        %v1799 = vrot.slane %v1331, 2
        %v1800 = vrot.slane %v1222, 2
        %v1801 = vrot.slane %v1224, 2
        %v1802 = vrot.slane %v1335, 2
        %v1803 = vrot.slane %v1337, 2
        %v1836 = vadd.f32 %v1708, %v1772
        %v1837 = vadd.f32 %v1709, %v1773
        %v1838 = vadd.f32 %v1710, %v1774
        %v1839 = vadd.f32 %v1711, %v1775
        %v1840 = vadd.f32 %v1712, %v1776
        %v1841 = vadd.f32 %v1713, %v1777
        %v1842 = vadd.f32 %v1714, %v1778
        %v1843 = vadd.f32 %v1715, %v1779
        %v1844 = vadd.f32 %v1716, %v1780
        %v1845 = vadd.f32 %v1717, %v1781
        %v1846 = vadd.f32 %v1718, %v1782
        %v1847 = vadd.f32 %v1719, %v1783
        %v1848 = vadd.f32 %v1720, %v1784
        %v1849 = vadd.f32 %v1721, %v1785
        %v1850 = vadd.f32 %v1722, %v1786
        %v1851 = vadd.f32 %v1723, %v1787
        %v1852 = vadd.f32 %v1724, %v1788
        %v1853 = vadd.f32 %v1725, %v1789
        %v1854 = vadd.f32 %v1726, %v1790
        %v1855 = vadd.f32 %v1727, %v1791
        %v1856 = vadd.f32 %v1728, %v1792
        %v1857 = vadd.f32 %v1729, %v1793
        %v1858 = vadd.f32 %v1730, %v1794
        %v1859 = vadd.f32 %v1731, %v1795
        %v1860 = vadd.f32 %v1732, %v1796
        %v1861 = vadd.f32 %v1733, %v1797
        %v1862 = vadd.f32 %v1734, %v1798
        %v1863 = vadd.f32 %v1735, %v1799
        %v1864 = vadd.f32 %v1736, %v1800
        %v1865 = vadd.f32 %v1737, %v1801
        %v1866 = vadd.f32 %v1738, %v1802
        %v1867 = vadd.f32 %v1739, %v1803
        %vm1868 = vcmask 1045504
        %v1869 = vsel %vm1868, %v1836, -inf
        %v1870 = vrot.slane %v1869, 4
        %v1871 = vmax.f32 %v1869, %v1870
        %v1872 = vrot.slane %v1871, 2
        %v1873 = vmax.f32 %v1871, %v1872
        %v1874 = vrot.slane %v1873, 1
        %v1875 = vmax.f32 %v1873, %v1874
        %v1876 = vsel %vm1868, %v1837, -inf
        %v1877 = vrot.slane %v1876, 4
        %v1878 = vmax.f32 %v1876, %v1877
        %v1879 = vrot.slane %v1878, 2
        %v1880 = vmax.f32 %v1878, %v1879
        %v1881 = vrot.slane %v1880, 1
        %v1882 = vmax.f32 %v1880, %v1881
        %v1883 = vsel %vm1868, %v1838, -inf
        %v1884 = vrot.slane %v1883, 4
        %v1885 = vmax.f32 %v1883, %v1884
        %v1886 = vrot.slane %v1885, 2
        %v1887 = vmax.f32 %v1885, %v1886
        %v1888 = vrot.slane %v1887, 1
        %v1889 = vmax.f32 %v1887, %v1888
        %v1890 = vsel %vm1868, %v1839, -inf
        %v1891 = vrot.slane %v1890, 4
        %v1892 = vmax.f32 %v1890, %v1891
        %v1893 = vrot.slane %v1892, 2
        %v1894 = vmax.f32 %v1892, %v1893
        %v1895 = vrot.slane %v1894, 1
        %v1896 = vmax.f32 %v1894, %v1895
        %v1897 = vsel %vm1868, %v1840, -inf
        %v1898 = vrot.slane %v1897, 4
        %v1899 = vmax.f32 %v1897, %v1898
        %v1900 = vrot.slane %v1899, 2
        %v1901 = vmax.f32 %v1899, %v1900
        %v1902 = vrot.slane %v1901, 1
        %v1903 = vmax.f32 %v1901, %v1902
        %v1904 = vsel %vm1868, %v1841, -inf
        %v1905 = vrot.slane %v1904, 4
        %v1906 = vmax.f32 %v1904, %v1905
        %v1907 = vrot.slane %v1906, 2
        %v1908 = vmax.f32 %v1906, %v1907
        %v1909 = vrot.slane %v1908, 1
        %v1910 = vmax.f32 %v1908, %v1909
        %v1911 = vsel %vm1868, %v1842, -inf
        %v1912 = vrot.slane %v1911, 4
        %v1913 = vmax.f32 %v1911, %v1912
        %v1914 = vrot.slane %v1913, 2
        %v1915 = vmax.f32 %v1913, %v1914
        %v1916 = vrot.slane %v1915, 1
        %v1917 = vmax.f32 %v1915, %v1916
        %v1918 = vsel %vm1868, %v1843, -inf
        %v1919 = vrot.slane %v1918, 4
        %v1920 = vmax.f32 %v1918, %v1919
        %v1921 = vrot.slane %v1920, 2
        %v1922 = vmax.f32 %v1920, %v1921
        %v1923 = vrot.slane %v1922, 1
        %v1924 = vmax.f32 %v1922, %v1923
        %v1925 = vsel %vm1868, %v1844, -inf
        %v1926 = vrot.slane %v1925, 4
        %v1927 = vmax.f32 %v1925, %v1926
        %v1928 = vrot.slane %v1927, 2
        %v1929 = vmax.f32 %v1927, %v1928
        %v1930 = vrot.slane %v1929, 1
        %v1931 = vmax.f32 %v1929, %v1930
        %v1932 = vsel %vm1868, %v1845, -inf
        %v1933 = vrot.slane %v1932, 4
        %v1934 = vmax.f32 %v1932, %v1933
        %v1935 = vrot.slane %v1934, 2
        %v1936 = vmax.f32 %v1934, %v1935
        %v1937 = vrot.slane %v1936, 1
        %v1938 = vmax.f32 %v1936, %v1937
        %v1939 = vsel %vm1868, %v1846, -inf
        %v1940 = vrot.slane %v1939, 4
        %v1941 = vmax.f32 %v1939, %v1940
        %v1942 = vrot.slane %v1941, 2
        %v1943 = vmax.f32 %v1941, %v1942
        %v1944 = vrot.slane %v1943, 1
        %v1945 = vmax.f32 %v1943, %v1944
        %v1946 = vsel %vm1868, %v1847, -inf
        %v1947 = vrot.slane %v1946, 4
        %v1948 = vmax.f32 %v1946, %v1947
        %v1949 = vrot.slane %v1948, 2
        %v1950 = vmax.f32 %v1948, %v1949
        %v1951 = vrot.slane %v1950, 1
        %v1952 = vmax.f32 %v1950, %v1951
        %v1953 = vsel %vm1868, %v1848, -inf
        %v1954 = vrot.slane %v1953, 4
        %v1955 = vmax.f32 %v1953, %v1954
        %v1956 = vrot.slane %v1955, 2
        %v1957 = vmax.f32 %v1955, %v1956
        %v1958 = vrot.slane %v1957, 1
        %v1959 = vmax.f32 %v1957, %v1958
        %v1960 = vsel %vm1868, %v1849, -inf
        %v1961 = vrot.slane %v1960, 4
        %v1962 = vmax.f32 %v1960, %v1961
        %v1963 = vrot.slane %v1962, 2
        %v1964 = vmax.f32 %v1962, %v1963
        %v1965 = vrot.slane %v1964, 1
        %v1966 = vmax.f32 %v1964, %v1965
        %v1967 = vsel %vm1868, %v1850, -inf
        %v1968 = vrot.slane %v1967, 4
        %v1969 = vmax.f32 %v1967, %v1968
        %v1970 = vrot.slane %v1969, 2
        %v1971 = vmax.f32 %v1969, %v1970
        %v1972 = vrot.slane %v1971, 1
        %v1973 = vmax.f32 %v1971, %v1972
        %v1974 = vsel %vm1868, %v1851, -inf
        %v1975 = vrot.slane %v1974, 4
        %v1976 = vmax.f32 %v1974, %v1975
        %v1977 = vrot.slane %v1976, 2
        %v1978 = vmax.f32 %v1976, %v1977
        %v1979 = vrot.slane %v1978, 1
        %v1980 = vmax.f32 %v1978, %v1979
        %v1981 = vsel %vm1868, %v1852, -inf
        %v1982 = vrot.slane %v1981, 4
        %v1983 = vmax.f32 %v1981, %v1982
        %v1984 = vrot.slane %v1983, 2
        %v1985 = vmax.f32 %v1983, %v1984
        %v1986 = vrot.slane %v1985, 1
        %v1987 = vmax.f32 %v1985, %v1986
        %v1988 = vsel %vm1868, %v1853, -inf
        %v1989 = vrot.slane %v1988, 4
        %v1990 = vmax.f32 %v1988, %v1989
        %v1991 = vrot.slane %v1990, 2
        %v1992 = vmax.f32 %v1990, %v1991
        %v1993 = vrot.slane %v1992, 1
        %v1994 = vmax.f32 %v1992, %v1993
        %v1995 = vsel %vm1868, %v1854, -inf
        %v1996 = vrot.slane %v1995, 4
        %v1997 = vmax.f32 %v1995, %v1996
        %v1998 = vrot.slane %v1997, 2
        %v1999 = vmax.f32 %v1997, %v1998
        %v2000 = vrot.slane %v1999, 1
        %v2001 = vmax.f32 %v1999, %v2000
        %v2002 = vsel %vm1868, %v1855, -inf
        %v2003 = vrot.slane %v2002, 4
        %v2004 = vmax.f32 %v2002, %v2003
        %v2005 = vrot.slane %v2004, 2
        %v2006 = vmax.f32 %v2004, %v2005
        %v2007 = vrot.slane %v2006, 1
        %v2008 = vmax.f32 %v2006, %v2007
        %v2009 = vsel %vm1868, %v1856, -inf
        %v2010 = vrot.slane %v2009, 4
        %v2011 = vmax.f32 %v2009, %v2010
        %v2012 = vrot.slane %v2011, 2
        %v2013 = vmax.f32 %v2011, %v2012
        %v2014 = vrot.slane %v2013, 1
        %v2015 = vmax.f32 %v2013, %v2014
        %v2016 = vsel %vm1868, %v1857, -inf
        %v2017 = vrot.slane %v2016, 4
        %v2018 = vmax.f32 %v2016, %v2017
        %v2019 = vrot.slane %v2018, 2
        %v2020 = vmax.f32 %v2018, %v2019
        %v2021 = vrot.slane %v2020, 1
        %v2022 = vmax.f32 %v2020, %v2021
        %v2023 = vsel %vm1868, %v1858, -inf
        %v2024 = vrot.slane %v2023, 4
        %v2025 = vmax.f32 %v2023, %v2024
        %v2026 = vrot.slane %v2025, 2
        %v2027 = vmax.f32 %v2025, %v2026
        %v2028 = vrot.slane %v2027, 1
        %v2029 = vmax.f32 %v2027, %v2028
        %v2030 = vsel %vm1868, %v1859, -inf
        %v2031 = vrot.slane %v2030, 4
        %v2032 = vmax.f32 %v2030, %v2031
        %v2033 = vrot.slane %v2032, 2
        %v2034 = vmax.f32 %v2032, %v2033
        %v2035 = vrot.slane %v2034, 1
        %v2036 = vmax.f32 %v2034, %v2035
        %v2037 = vsel %vm1868, %v1860, -inf
        %v2038 = vrot.slane %v2037, 4
        %v2039 = vmax.f32 %v2037, %v2038
        %v2040 = vrot.slane %v2039, 2
        %v2041 = vmax.f32 %v2039, %v2040
        %v2042 = vrot.slane %v2041, 1
        %v2043 = vmax.f32 %v2041, %v2042
        %v2044 = vsel %vm1868, %v1861, -inf
        %v2045 = vrot.slane %v2044, 4
        %v2046 = vmax.f32 %v2044, %v2045
        %v2047 = vrot.slane %v2046, 2
        %v2048 = vmax.f32 %v2046, %v2047
        %v2049 = vrot.slane %v2048, 1
        %v2050 = vmax.f32 %v2048, %v2049
        %v2051 = vsel %vm1868, %v1862, -inf
        %v2052 = vrot.slane %v2051, 4
        %v2053 = vmax.f32 %v2051, %v2052
        %v2054 = vrot.slane %v2053, 2
        %v2055 = vmax.f32 %v2053, %v2054
        %v2056 = vrot.slane %v2055, 1
        %v2057 = vmax.f32 %v2055, %v2056
        %v2058 = vsel %vm1868, %v1863, -inf
        %v2059 = vrot.slane %v2058, 4
        %v2060 = vmax.f32 %v2058, %v2059
        %v2061 = vrot.slane %v2060, 2
        %v2062 = vmax.f32 %v2060, %v2061
        %v2063 = vrot.slane %v2062, 1
        %v2064 = vmax.f32 %v2062, %v2063
        %v2065 = vsel %vm1868, %v1864, -inf
        %v2066 = vrot.slane %v2065, 4
        %v2067 = vmax.f32 %v2065, %v2066
        %v2068 = vrot.slane %v2067, 2
        %v2069 = vmax.f32 %v2067, %v2068
        %v2070 = vrot.slane %v2069, 1
        %v2071 = vmax.f32 %v2069, %v2070
        %v2072 = vsel %vm1868, %v1865, -inf
        %v2073 = vrot.slane %v2072, 4
        %v2074 = vmax.f32 %v2072, %v2073
        %v2075 = vrot.slane %v2074, 2
        %v2076 = vmax.f32 %v2074, %v2075
        %v2077 = vrot.slane %v2076, 1
        %v2078 = vmax.f32 %v2076, %v2077
        %v2079 = vsel %vm1868, %v1866, -inf
        %v2080 = vrot.slane %v2079, 4
        %v2081 = vmax.f32 %v2079, %v2080
        %v2082 = vrot.slane %v2081, 2
        %v2083 = vmax.f32 %v2081, %v2082
        %v2084 = vrot.slane %v2083, 1
        %v2085 = vmax.f32 %v2083, %v2084
        %v2086 = vsel %vm1868, %v1867, -inf
        %v2087 = vrot.slane %v2086, 4
        %v2088 = vmax.f32 %v2086, %v2087
        %v2089 = vrot.slane %v2088, 2
        %v2090 = vmax.f32 %v2088, %v2089
        %v2091 = vrot.slane %v2090, 1
        %v2092 = vmax.f32 %v2090, %v2091
        %vm2109 = vcmask 1041409
        %v2110 = vsel %vm2109, %v1356, %v1344
        %vm2111 = vcmask 1042434
        %v2112 = vsel %vm2111, %v1368, %v2110
        %vm2113 = vcmask 1043459
        %v2114 = vsel %vm2113, %v1380, %v2112
        %vm2115 = vcmask 1044484
        %v2116 = vsel %vm2115, %v1392, %v2114
        %vm2117 = vcmask 1045509
        %v2118 = vsel %vm2117, %v1404, %v2116
        %vm2119 = vcmask 1046534
        %v2120 = vsel %vm2119, %v1416, %v2118
        %vm2121 = vcmask 1047559
        %v2122 = vsel %vm2121, %v1428, %v2120
        %v2123 = vsel %vm2109, %v1362, %v1350
        %v2124 = vsel %vm2111, %v1374, %v2123
        %v2125 = vsel %vm2113, %v1386, %v2124
        %v2126 = vsel %vm2115, %v1398, %v2125
        %v2127 = vsel %vm2117, %v1410, %v2126
        %v2128 = vsel %vm2119, %v1422, %v2127
        %v2129 = vsel %vm2121, %v1434, %v2128
        %v2148 = vsel %vm2109, %v1520, %v1506
        %v2149 = vsel %vm2111, %v1534, %v2148
        %v2150 = vsel %vm2113, %v1548, %v2149
        %v2151 = vsel %vm2115, %v1562, %v2150
        %v2152 = vsel %vm2117, %v1576, %v2151
        %v2153 = vsel %vm2119, %v1590, %v2152
        %v2154 = vsel %vm2121, %v1604, %v2153
        %v2155 = vsel %vm2109, %v1527, %v1513
        %v2156 = vsel %vm2111, %v1541, %v2155
        %v2157 = vsel %vm2113, %v1555, %v2156
        %v2158 = vsel %vm2115, %v1569, %v2157
        %v2159 = vsel %vm2117, %v1583, %v2158
        %v2160 = vsel %vm2119, %v1597, %v2159
        %v2161 = vsel %vm2121, %v1611, %v2160
        %v2196 = vsel %vm2109, %v1903, %v1875
        %v2197 = vsel %vm2111, %v1931, %v2196
        %v2198 = vsel %vm2113, %v1959, %v2197
        %v2199 = vsel %vm2115, %v1987, %v2198
        %v2200 = vsel %vm2117, %v2015, %v2199
        %v2201 = vsel %vm2119, %v2043, %v2200
        %v2202 = vsel %vm2121, %v2071, %v2201
        %v2203 = vsel %vm2109, %v1910, %v1882
        %v2204 = vsel %vm2111, %v1938, %v2203
        %v2205 = vsel %vm2113, %v1966, %v2204
        %v2206 = vsel %vm2115, %v1994, %v2205
        %v2207 = vsel %vm2117, %v2022, %v2206
        %v2208 = vsel %vm2119, %v2050, %v2207
        %v2209 = vsel %vm2121, %v2078, %v2208
        %v2210 = vsel %vm2109, %v1917, %v1889
        %v2211 = vsel %vm2111, %v1945, %v2210
        %v2212 = vsel %vm2113, %v1973, %v2211
        %v2213 = vsel %vm2115, %v2001, %v2212
        %v2214 = vsel %vm2117, %v2029, %v2213
        %v2215 = vsel %vm2119, %v2057, %v2214
        %v2216 = vsel %vm2121, %v2085, %v2215
        %v2217 = vsel %vm2109, %v1924, %v1896
        %v2218 = vsel %vm2111, %v1952, %v2217
        %v2219 = vsel %vm2113, %v1980, %v2218
        %v2220 = vsel %vm2115, %v2008, %v2219
        %v2221 = vsel %vm2117, %v2036, %v2220
        %v2222 = vsel %vm2119, %v2064, %v2221
        %v2223 = vsel %vm2121, %v2092, %v2222
        %v2228 = vld [vmem:[#allocation7] sm:$0xff]
        %v2230 = vlaneseq
        %v2231 = vshrl.u32 %v2230, 7
        %v2232 = vsub.s32 0, %v2231
        %v2233 = vrot.slane %v2228, %v2232
        %v2234 = vlaneseq
        %v2235 = vshrl.u32 %v2234, 7
        %v2236 = vsub.s32 1, %v2235
        %v2237 = vrot.slane %v2228, %v2236
        %v2238 = vlaneseq
        %v2239 = vshrl.u32 %v2238, 7
        %v2240 = vsub.s32 2, %v2239
        %v2241 = vrot.slane %v2228, %v2240
        %v2242 = vlaneseq
        %v2243 = vshrl.u32 %v2242, 7
        %v2244 = vsub.s32 3, %v2243
        %v2245 = vrot.slane %v2228, %v2244
        %v2246 = vlaneseq
        %v2247 = vshrl.u32 %v2246, 7
        %v2248 = vsub.s32 4, %v2247
        %v2249 = vrot.slane %v2228, %v2248
        %v2250 = vlaneseq
        %v2251 = vshrl.u32 %v2250, 7
        %v2252 = vsub.s32 5, %v2251
        %v2253 = vrot.slane %v2228, %v2252
        %v2254 = vlaneseq
        %v2255 = vshrl.u32 %v2254, 7
        %v2256 = vsub.s32 6, %v2255
        %v2257 = vrot.slane %v2228, %v2256
        %v2258 = vlaneseq
        %v2259 = vshrl.u32 %v2258, 7
        %v2260 = vsub.s32 7, %v2259
        %v2261 = vrot.slane %v2228, %v2260
        %v2270 = vadd.f32 %v2122, %v2233
        %v2271 = vadd.f32 %v2129, %v2237
        %v2272 = vadd.f32 %v2154, %v2241
        %v2273 = vadd.f32 %v2161, %v2245
        %v2274 = vadd.f32 %v2202, %v2249
        %v2275 = vadd.f32 %v2209, %v2253
        %v2276 = vadd.f32 %v2216, %v2257
        %v2277 = vadd.f32 %v2223, %v2261
        %v2278 = vtanh.pop %v2270
        %v2279 = vtanh.pop %v2271
        %v2280 = vtanh.pop %v2272
        %v2281 = vtanh.pop %v2273
        %v2282 = vtanh.pop %v2274
        %v2283 = vtanh.pop %v2275
        %v2284 = vtanh.pop %v2276
        %v2285 = vtanh.pop %v2277
        %2286 = vst [vmem:[%s215] sm:$0xff] %v2278
        %2287 = vst [vmem:[%s215 + $0x8] sm:$0xff] %v2279
        %2288 = vst [vmem:[%s215 + $0x10] sm:$0xff] %v2280
        %2289 = vst [vmem:[%s215 + $0x18] sm:$0xff] %v2281
        %2290 = vst [vmem:[%s215 + $0x20] sm:$0xff] %v2282
        %2291 = vst [vmem:[%s215 + $0x28] sm:$0xff] %v2283
        %2292 = vst [vmem:[%s215 + $0x30] sm:$0xff] %v2284
        %2293 = vst [vmem:[%s215 + $0x38] sm:$0xff] %v2285
        %s2294 = sand.u32 %s97, 1
        %s2295 = scalar_lea.sflag [#allocation4], %s2294
        %s2296 = sand.u32 %s97, 1
        %s2297 = smul.addr %s2296, 64
        %s2298 = scalar_lea.vmem [#allocation8], %s2297
        // Predicated region
        $region45: #{tpu_custom_call.1} parent=31 // pred_check
          %p2299 = pneg %p107
        $region46: #{tpu_custom_call.1} parent=31 // pred_check_branch
          %2301 = sbr.rel (%p2299) target = $region48
        $region47: #{tpu_custom_call.1} parent=31 // pred_region
          %s2303 = ssub.s32 1024, 1024
          %2304 = vsyncadd %s2295, %s2303
          %s2305 = smul.addr %s21, 8
          %s2306 = smul.addr %s2305, 128
          %s2307 = scalar_lea.hbm %s3, %s2306
          %s2309 = sshll.u32 %s2298, 4
          %s2310 = int_to_ptr.vmem [resolvable:$true] %s2309
          %2312 = dma.vmem_to_hbm [thread:$0]  %s2310, 1024, %s2307, %s2295
        $region48: #{tpu_custom_call.1} parent=31 // pred_fallthru
          _
      $region32: #{tpu_custom_call.1} parent=5 // pred_fallthru
        _
      %p2313 = scmp.le.s32.totalorder 2, %s16
      // Predicated region
      $region49: #{tpu_custom_call.1} parent=5 // pred_check
        %p2314 = pneg %p2313
      $region50: #{tpu_custom_call.1} parent=5 // pred_check_branch
        %2316 = sbr.rel (%p2314) target = $region52
      $region51: #{tpu_custom_call.1} parent=5 // pred_region
        %s2317 = ssub.s32 %s16, 2
        // Predicated region
        $region53: #{tpu_custom_call.1} parent=51 // pred_check
          %p2318 = pneg %p113
        $region54: #{tpu_custom_call.1} parent=51 // pred_check_branch
          %2320 = sbr.rel (%p2318) target = $region56
        $region55: #{tpu_custom_call.1} parent=51 // pred_region
          %s2321 = sand.u32 %s98, 1
          %s2322 = scalar_lea.sflag [#allocation4], %s2321
          %s2323 = sand.u32 %s98, 1
          %s2324 = smul.addr %s2323, 64
          %s2325 = scalar_lea.vmem [#allocation8], %s2324
          %2326 = dma.done %s2322, 1024
        $region56: #{tpu_custom_call.1} parent=51 // pred_fallthru
          _
      $region52: #{tpu_custom_call.1} parent=5 // pred_fallthru
        _
    $region6: #{tpu_custom_call.1} parent=1 // loop_footer
      %s20 = sadd.s32 1, %s16
    $region7: #{tpu_custom_call.1} parent=1 // loop_footer_branch
      %15 = sbr.rel target = $region3
    $region8: #{tpu_custom_call.1} parent=1 // loop_exit
      _
    %2327 = vsyncpa [#allocation3], 1
    %s2328 = scalar_lea.sflag [#allocation3], 1
    %2329 = vsyncpa %s2328, 1
    %2330 = vsyncpa [#allocation6], 1
    %2331 = vsyncpa [#allocation4], 1
    %s2332 = scalar_lea.sflag [#allocation4], 1
    %2333 = vsyncpa %s2332, 1

</llo_original>
